<compile_context>
chip_gen: v5e
topology: v5e:2x2
jax: 0.10.0
libtpu: 0.0.40
codegen_flags: <defaults>
</compile_context>

<pallas_src>
import math
import functools

import jax
import jax.numpy as jnp
from jax.experimental import pallas as pl
from jax.experimental.pallas import tpu as pltpu


MM_DTYPE = jnp.bfloat16      # MXU input dtype for weight matmuls (f32 accumulation)
NEG_INF = -1e30              # additive key-padding bias
LANE = 128                   # lane-dense output padding


# ------------------------------ kernel helpers -------------------------------

def _layer_norm(x, w, b, eps=1e-5):
    mu = jnp.mean(x, axis=-1, keepdims=True)
    var = jnp.mean((x - mu) ** 2, axis=-1, keepdims=True)
    return (x - mu) * jax.lax.rsqrt(var + eps) * w + b


def _mm(x, w):
    # weight matmul on the MXU; weights arrive pre-cast to MM_DTYPE, accumulate f32
    return jnp.dot(x.astype(w.dtype), w, preferred_element_type=jnp.float32)


# --------------------------------- kernel ------------------------------------

def fused_forward_kernel(word_ref, pos_ref, mask_ref, elnw_ref, elnb_ref,
                         wq_ref, bq_ref, wk_ref, bk_ref, wv_ref, bv_ref,
                         wo_ref, bo_ref, ln1w_ref, ln1b_ref,
                         w1_ref, b1_ref, w2_ref, b2_ref, ln2w_ref, ln2b_ref,
                         fc1w_ref, fc1b_ref, fc2w_ref, fc2b_ref,
                         o_ref, x_scr, *, nhead):
    layer = pl.program_id(1)
    bt, seq, edim = word_ref.shape
    bs = bt * seq
    dh = edim // nhead

    # ---- embeddings: word + pos, LayerNorm (dropout = identity at eval) ----
    @pl.when(layer == 0)
    def _():
        x0 = (word_ref[...] + pos_ref[...]).reshape(bs, edim)
        x_scr[...] = _layer_norm(x0, elnw_ref[...], elnb_ref[...])

    x = x_scr[...]                      # (bt*S, E) f32, resident in VMEM
    mb = mask_ref[...]                  # (bt, 1, S) additive key-padding bias

    # ---- multi-head self-attention ------------------------------------------
    # Heads come from host-side pre-split / pre-transposed weights, so there is
    # no lane-dim slicing and no concat; 1/sqrt(dh) is already folded into wq/bq.
    attn = jnp.zeros((bs, edim), jnp.float32)
    for h in range(nhead):              # static unroll over heads
        qh = (_mm(x, wq_ref[0, h]) + bq_ref[0, h]).reshape(bt, seq, dh)
        kh = (_mm(x, wk_ref[0, h]) + bk_ref[0, h]).reshape(bt, seq, dh)
        vh = (_mm(x, wv_ref[0, h]) + bv_ref[0, h]).reshape(bt, seq, dh)
        # TODO(synk): for long sequences this dense (bt,S,S) score tensor should
        # be replaced by a flash-style tiled online softmax over key blocks.
        s = jnp.einsum('bqd,bkd->bqk', qh, kh) + mb
        m = jnp.max(s, axis=-1, keepdims=True)
        p = jnp.exp(s - m)
        p = p * pl.reciprocal(jnp.sum(p, axis=-1, keepdims=True), approx=True)
        ctx = jnp.einsum('bqk,bkd->bqd', p, vh).reshape(bs, dh)
        attn = attn + _mm(ctx, wo_ref[0, h])   # out-projection distributes over heads
    attn = attn + bo_ref[0]

    x1 = _layer_norm(x + attn, ln1w_ref[0], ln1b_ref[0])        # post-norm #1

    # ---- feed forward (SparseLayer == masked dense linear) -> ReLU -> linear -
    h1 = jnp.maximum(_mm(x1, w1_ref[0]) + b1_ref[0], 0.0)
    x2 = _layer_norm(x1 + _mm(h1, w2_ref[0]) + b2_ref[0],
                     ln2w_ref[0], ln2b_ref[0])                  # post-norm #2

    x_scr[...] = x2

    # ---- classifier on CLS token (last layer iteration only) ----------------
    @pl.when(layer == pl.num_programs(1) - 1)
    def _():
        cls = x2.reshape(bt, seq, edim)[:, 0, :]                # (bt, E)
        hc = jnp.maximum(_mm(cls, fc1w_ref[...]) + fc1b_ref[...], 0.0)
        logits = _mm(hc, fc2w_ref[...]) + fc2b_ref[...]         # (bt, 128) lane-dense
        o_ref[...] = logits.reshape(bt, 1, -1)


# ------------------------- parameter initialization --------------------------

def init_params(key, vocab_size, max_len, embed_dim, ff_dim, hidden_dim,
                target_size, num_layers, p_sparse=0.25, p_cls=0.25):
    """PyTorch-layout parameters (Linear weights are (out_features, in_features))."""
    keys = iter(jax.random.split(key, 16 + 16 * num_layers))
    nrm = lambda shape, s=0.05: jax.random.normal(next(keys), shape, jnp.float32) * s

    def sparsify(w, p):
        # SparseLayer.initialize_sparse_weights: keep each weight w.p. p
        keep = jax.random.uniform(next(keys), w.shape) < p
        return w * keep.astype(w.dtype)

    row = lambda n: nrm((n,))
    params = {
        'word_emb': nrm((vocab_size, embed_dim), 0.1),
        'pos_emb': nrm((max_len, embed_dim), 0.1),
        'emb_lnw': jnp.ones((embed_dim,), jnp.float32),
        'emb_lnb': jnp.zeros((embed_dim,), jnp.float32),
        'layers': [],
    }
    for _ in range(num_layers):
        params['layers'].append({
            'wq': nrm((embed_dim, embed_dim)), 'bq': row(embed_dim),
            'wk': nrm((embed_dim, embed_dim)), 'bk': row(embed_dim),
            'wv': nrm((embed_dim, embed_dim)), 'bv': row(embed_dim),
            'wo': nrm((embed_dim, embed_dim)), 'bo': row(embed_dim),
            'ln1w': jnp.ones((embed_dim,), jnp.float32),
            'ln1b': jnp.zeros((embed_dim,), jnp.float32),
            'w1': sparsify(nrm((ff_dim, embed_dim)), p_sparse), 'b1': row(ff_dim),
            'w2': sparsify(nrm((embed_dim, ff_dim)), p_sparse), 'b2': row(embed_dim),
            'ln2w': jnp.ones((embed_dim,), jnp.float32),
            'ln2b': jnp.zeros((embed_dim,), jnp.float32),
        })
    params['fc1w'] = sparsify(nrm((hidden_dim, embed_dim)), p_cls)
    params['fc1b'] = row(hidden_dim)
    params['fc2w'] = sparsify(nrm((target_size, hidden_dim)), p_cls)
    params['fc2b'] = row(target_size)
    return params


def pack_params(params, nhead):
    """Host-side, one-time repack: pre-transpose, per-head split, fold 1/sqrt(dh),
    stack layers on a leading L axis, bf16-cast weights, pad classifier lanes."""
    E = params['word_emb'].shape[-1]
    dh = E // nhead
    scale = 1.0 / math.sqrt(dh)

    def heads_in(w, b, s=1.0):
        # (out=E, in=E) torch layout -> (H, E_in, dh); bias (E,) -> (H, 1, dh)
        wt = (w.T * s).reshape(E, nhead, dh).transpose(1, 0, 2).astype(MM_DTYPE)
        bh = (b * s).reshape(nhead, 1, dh).astype(jnp.float32)
        return wt, bh

    layers = []
    for lp in params['layers']:
        wq, bq = heads_in(lp['wq'], lp['bq'], scale)     # scale folded into Q
        wk, bk = heads_in(lp['wk'], lp['bk'])
        wv, bv = heads_in(lp['wv'], lp['bv'])
        layers.append(dict(
            wq=wq, bq=bq, wk=wk, bk=bk, wv=wv, bv=bv,
            wo=lp['wo'].T.reshape(nhead, dh, E).astype(MM_DTYPE),
            bo=lp['bo'].reshape(1, E),
            ln1w=lp['ln1w'].reshape(1, E), ln1b=lp['ln1b'].reshape(1, E),
            w1=lp['w1'].T.astype(MM_DTYPE), b1=lp['b1'].reshape(1, -1),
            w2=lp['w2'].T.astype(MM_DTYPE), b2=lp['b2'].reshape(1, E),
            ln2w=lp['ln2w'].reshape(1, E), ln2b=lp['ln2b'].reshape(1, E),
        ))
    stacked = {k: jnp.stack([l[k] for l in layers]) for k in layers[0]}

    tgt, hid = params['fc2w'].shape
    P = ((tgt + LANE - 1) // LANE) * LANE
    fc2w = jnp.zeros((hid, P), jnp.float32).at[:, :tgt].set(params['fc2w'].T)
    fc2b = jnp.zeros((1, P), jnp.float32).at[:, :tgt].set(params['fc2b'].reshape(1, -1))

    packed = dict(
        word_emb=params['word_emb'],
        pos_emb=params['pos_emb'],
        emb_lnw=params['emb_lnw'].reshape(1, E),
        emb_lnb=params['emb_lnb'].reshape(1, E),
        fc1w=params['fc1w'].T.astype(MM_DTYPE),
        fc1b=params['fc1b'].reshape(1, -1),
        fc2w=fc2w.astype(MM_DTYPE),
        fc2b=fc2b,
        **stacked,
    )
    return packed


# ------------------------------ forward pass ----------------------------------

def sparse_model_forward(packed, input_ids, padding_mask, *, nhead, target_size, bt=1):
    B, S = input_ids.shape
    E = packed['word_emb'].shape[-1]
    L = packed['wq'].shape[0]
    P = packed['fc2w'].shape[-1]
    max_len = packed['pos_emb'].shape[0]
    assert S == max_len, "original pos-embedding add only broadcasts when S == max_len"
    assert B % bt == 0

    # Embedding row-gather stays in XLA glue (data-dependent lookup); its result
    # feeds the single fused kernel directly, no intermediate kernel boundary.
    # TODO(synk): could be moved in-kernel with scalar-prefetched ids + pl.Element.
    word = packed['word_emb'][input_ids]                        # (B, S, E) f32
    pos = packed['pos_emb'][None, :, :]                         # (1, S, E)
    maskbias = jnp.where(padding_mask, NEG_INF, 0.0).astype(jnp.float32)[:, None, :]

    def bspec(shape):     # batch-tiled operand
        z = (0,) * (len(shape) - 1)
        return pl.BlockSpec((bt,) + tuple(shape[1:]), lambda b, l, z=z: (b,) + z)

    def fspec(shape):     # full-array operand (same block every grid step)
        z = (0,) * len(shape)
        return pl.BlockSpec(tuple(shape), lambda b, l, z=z: z)

    def lspec(shape):     # per-layer stacked operand, streamed along the L axis
        z = (0,) * (len(shape) - 1)
        return pl.BlockSpec((1,) + tuple(shape[1:]), lambda b, l, z=z: (l,) + z)

    ins = [
        (word,               bspec(word.shape)),
        (pos,                fspec(pos.shape)),
        (maskbias,           bspec(maskbias.shape)),
        (packed['emb_lnw'],  fspec(packed['emb_lnw'].shape)),
        (packed['emb_lnb'],  fspec(packed['emb_lnb'].shape)),
    ]
    for name in ('wq', 'bq', 'wk', 'bk', 'wv', 'bv', 'wo', 'bo',
                 'ln1w', 'ln1b', 'w1', 'b1', 'w2', 'b2', 'ln2w', 'ln2b'):
        ins.append((packed[name], lspec(packed[name].shape)))
    for name in ('fc1w', 'fc1b', 'fc2w', 'fc2b'):
        ins.append((packed[name], fspec(packed[name].shape)))
    vals, specs = zip(*ins)

    out = pl.pallas_call(
        functools.partial(fused_forward_kernel, nhead=nhead),
        out_shape=jax.ShapeDtypeStruct((B, 1, P), jnp.float32),
        grid_spec=pltpu.PrefetchScalarGridSpec(
            num_scalar_prefetch=0,
            grid=(B // bt, L),                       # (batch tiles, encoder layers)
            in_specs=list(specs),
            out_specs=pl.BlockSpec((bt, 1, P), lambda b, l: (b, 0, 0)),
            scratch_shapes=[pltpu.VMEM((bt * S, E), jnp.float32)],
        ),
        compiler_params=pltpu.CompilerParams(
            dimension_semantics=("parallel", "arbitrary")),
    )(*vals)

    return out[:, 0, :target_size]


# TODO(synk): SparseLayer.evolve / cut_connections / grow_connections are
# training-time topology mutations (topk + random resampling on host) and are
# not part of the forward pass; they are not implemented as kernels.


if __name__ == "__main__":
    # small args: embed_dim=32, nhead=4, feedforward_dim=64,
    # classifier_hidden_dim=32, target_size=60, num_transformer_layers=2,
    # max_len == seq_len == 8 (required by the original pos-embedding broadcast)
    B, S, E, NHEAD = 2, 8, 32, 4
    FF, HID, TGT = 64, 32, 60
    VOCAB, MAX_LEN, N_LAYERS = 100, 8, 2

    root = jax.random.PRNGKey(0)
    k_ids, k_params = jax.random.split(root)

    params = init_params(k_params, VOCAB, MAX_LEN, E, FF, HID, TGT, N_LAYERS)
    packed = pack_params(params, NHEAD)

    input_ids = jax.random.randint(k_ids, (B, S), 0, VOCAB, dtype=jnp.int32)
    padding_mask = jnp.zeros((B, S), dtype=bool).at[1, 6:].set(True)   # True = pad

    fwd = jax.jit(functools.partial(sparse_model_forward,
                                    nhead=NHEAD, target_size=TGT, bt=1))
    out = fwd(packed, input_ids, padding_mask)
    out = jax.block_until_ready(out)
    assert out.shape == (B, TGT) and out.dtype == jnp.float32
    print("KERNEL_OK")
</pallas_src>

<mosaic_0001>
module attributes {stable_mosaic.version = 11 : i64} {
  func.func @fused_forward_kernel(%arg0: i32, %arg1: i32, %arg2: memref<1x8x32xf32, #tpu.memory_space<vmem>>, %arg3: memref<1x8x32xf32, #tpu.memory_space<vmem>>, %arg4: memref<1x1x8xf32, #tpu.memory_space<vmem>>, %arg5: memref<1x32xf32, #tpu.memory_space<vmem>>, %arg6: memref<1x32xf32, #tpu.memory_space<vmem>>, %arg7: memref<1x4x32x8xbf16, #tpu.memory_space<vmem>>, %arg8: memref<1x4x1x8xf32, #tpu.memory_space<vmem>>, %arg9: memref<1x4x32x8xbf16, #tpu.memory_space<vmem>>, %arg10: memref<1x4x1x8xf32, #tpu.memory_space<vmem>>, %arg11: memref<1x4x32x8xbf16, #tpu.memory_space<vmem>>, %arg12: memref<1x4x1x8xf32, #tpu.memory_space<vmem>>, %arg13: memref<1x4x8x32xbf16, #tpu.memory_space<vmem>>, %arg14: memref<1x1x32xf32, #tpu.memory_space<vmem>>, %arg15: memref<1x1x32xf32, #tpu.memory_space<vmem>>, %arg16: memref<1x1x32xf32, #tpu.memory_space<vmem>>, %arg17: memref<1x32x64xbf16, #tpu.memory_space<vmem>>, %arg18: memref<1x1x64xf32, #tpu.memory_space<vmem>>, %arg19: memref<1x64x32xbf16, #tpu.memory_space<vmem>>, %arg20: memref<1x1x32xf32, #tpu.memory_space<vmem>>, %arg21: memref<1x1x32xf32, #tpu.memory_space<vmem>>, %arg22: memref<1x1x32xf32, #tpu.memory_space<vmem>>, %arg23: memref<32x32xbf16, #tpu.memory_space<vmem>>, %arg24: memref<1x32xf32, #tpu.memory_space<vmem>>, %arg25: memref<32x128xbf16, #tpu.memory_space<vmem>>, %arg26: memref<1x128xf32, #tpu.memory_space<vmem>>, %arg27: memref<1x1x128xf32, #tpu.memory_space<vmem>>, %arg28: memref<8x32xf32, #tpu.memory_space<vmem>>) attributes {dimension_semantics = [#tpu.dimension_semantics<parallel>, #tpu.dimension_semantics<arbitrary>], iteration_bounds = array<i64: 2, 2>, scalar_prefetch = 0 : i64, scratch_operands = 1 : i64, tpu.core_type = #tpu.core_type<tc>, window_params = [{transform_indices = @transform_0, window_bounds = array<i64: 1, 8, 32>}, {pipeline_mode = #tpu.pipeline_mode<synchronous>, transform_indices = @transform_1, window_bounds = array<i64: 1, 8, 32>}, {transform_indices = @transform_2, window_bounds = array<i64: 1, 1, 8>}, {pipeline_mode = #tpu.pipeline_mode<synchronous>, transform_indices = @transform_3, window_bounds = array<i64: 1, 32>}, {pipeline_mode = #tpu.pipeline_mode<synchronous>, transform_indices = @transform_4, window_bounds = array<i64: 1, 32>}, {transform_indices = @transform_5, window_bounds = array<i64: 1, 4, 32, 8>}, {transform_indices = @transform_6, window_bounds = array<i64: 1, 4, 1, 8>}, {transform_indices = @transform_7, window_bounds = array<i64: 1, 4, 32, 8>}, {transform_indices = @transform_8, window_bounds = array<i64: 1, 4, 1, 8>}, {transform_indices = @transform_9, window_bounds = array<i64: 1, 4, 32, 8>}, {transform_indices = @transform_10, window_bounds = array<i64: 1, 4, 1, 8>}, {transform_indices = @transform_11, window_bounds = array<i64: 1, 4, 8, 32>}, {transform_indices = @transform_12, window_bounds = array<i64: 1, 1, 32>}, {transform_indices = @transform_13, window_bounds = array<i64: 1, 1, 32>}, {transform_indices = @transform_14, window_bounds = array<i64: 1, 1, 32>}, {transform_indices = @transform_15, window_bounds = array<i64: 1, 32, 64>}, {transform_indices = @transform_16, window_bounds = array<i64: 1, 1, 64>}, {transform_indices = @transform_17, window_bounds = array<i64: 1, 64, 32>}, {transform_indices = @transform_18, window_bounds = array<i64: 1, 1, 32>}, {transform_indices = @transform_19, window_bounds = array<i64: 1, 1, 32>}, {transform_indices = @transform_20, window_bounds = array<i64: 1, 1, 32>}, {pipeline_mode = #tpu.pipeline_mode<synchronous>, transform_indices = @transform_21, window_bounds = array<i64: 32, 32>}, {pipeline_mode = #tpu.pipeline_mode<synchronous>, transform_indices = @transform_22, window_bounds = array<i64: 1, 32>}, {pipeline_mode = #tpu.pipeline_mode<synchronous>, transform_indices = @transform_23, window_bounds = array<i64: 32, 128>}, {pipeline_mode = #tpu.pipeline_mode<synchronous>, transform_indices = @transform_24, window_bounds = array<i64: 1, 128>}, {transform_indices = @transform_25, window_bounds = array<i64: 1, 1, 128>}]} {
    %c0_i32 = arith.constant 0 : i32
    %0 = arith.cmpi eq, %arg1, %c0_i32 : i32
    %1 = arith.extui %0 : i1 to i32
    %c0_i32_0 = arith.constant 0 : i32
    %2 = arith.cmpi ne, %1, %c0_i32_0 : i32
    scf.if %2 {
      %c0_189 = arith.constant 0 : index
      %c0_190 = arith.constant 0 : index
      %c0_191 = arith.constant 0 : index
      %274 = vector.load %arg2[%c0_189, %c0_190, %c0_191] : memref<1x8x32xf32, #tpu.memory_space<vmem>>, vector<1x8x32xf32>
      %c0_192 = arith.constant 0 : index
      %c0_193 = arith.constant 0 : index
      %c0_194 = arith.constant 0 : index
      %275 = vector.load %arg3[%c0_192, %c0_193, %c0_194] : memref<1x8x32xf32, #tpu.memory_space<vmem>>, vector<1x8x32xf32>
      %276 = arith.addf %274, %275 : vector<1x8x32xf32>
      %277 = vector.shape_cast %276 : vector<1x8x32xf32> to vector<8x32xf32>
      %c0_195 = arith.constant 0 : index
      %c0_196 = arith.constant 0 : index
      %278 = vector.load %arg5[%c0_195, %c0_196] : memref<1x32xf32, #tpu.memory_space<vmem>>, vector<1x32xf32>
      %c0_197 = arith.constant 0 : index
      %c0_198 = arith.constant 0 : index
      %279 = vector.load %arg6[%c0_197, %c0_198] : memref<1x32xf32, #tpu.memory_space<vmem>>, vector<1x32xf32>
      %cst_199 = arith.constant dense<0.000000e+00> : vector<8xf32>
      %280 = vector.multi_reduction <add>, %277, %cst_199 [1] : vector<8x32xf32> to vector<8xf32>
      %281 = vector.shape_cast %280 : vector<8xf32> to vector<8x1xf32>
      %cst_200 = arith.constant 3.200000e+01 : f32
      %282 = vector.broadcast %cst_200 : f32 to vector<8x1xf32>
      %283 = arith.divf %281, %282 : vector<8x1xf32>
      %284 = vector.broadcast %283 : vector<8x1xf32> to vector<8x32xf32>
      %285 = arith.subf %277, %284 : vector<8x32xf32>
      %286 = arith.mulf %285, %285 : vector<8x32xf32>
      %cst_201 = arith.constant dense<0.000000e+00> : vector<8xf32>
      %287 = vector.multi_reduction <add>, %286, %cst_201 [1] : vector<8x32xf32> to vector<8xf32>
      %288 = vector.shape_cast %287 : vector<8xf32> to vector<8x1xf32>
      %cst_202 = arith.constant 3.200000e+01 : f32
      %289 = vector.broadcast %cst_202 : f32 to vector<8x1xf32>
      %290 = arith.divf %288, %289 : vector<8x1xf32>
      %291 = vector.broadcast %283 : vector<8x1xf32> to vector<8x32xf32>
      %292 = arith.subf %277, %291 : vector<8x32xf32>
      %cst_203 = arith.constant 9.99999974E-6 : f32
      %293 = vector.broadcast %cst_203 : f32 to vector<8x1xf32>
      %294 = arith.addf %290, %293 : vector<8x1xf32>
      %295 = math.rsqrt %294 : vector<8x1xf32>
      %296 = vector.broadcast %295 : vector<8x1xf32> to vector<8x32xf32>
      %297 = arith.mulf %292, %296 : vector<8x32xf32>
      %298 = vector.broadcast %278 : vector<1x32xf32> to vector<8x32xf32>
      %299 = arith.mulf %297, %298 : vector<8x32xf32>
      %300 = vector.broadcast %279 : vector<1x32xf32> to vector<8x32xf32>
      %301 = arith.addf %299, %300 : vector<8x32xf32>
      %c0_204 = arith.constant 0 : index
      %c0_205 = arith.constant 0 : index
      %302 = vector.load %arg28[%c0_204, %c0_205] : memref<8x32xf32, #tpu.memory_space<vmem>>, vector<8x32xf32>
      tpu.vector_store %arg28[%c0_204, %c0_205], %301 {strides = array<i32>} : memref<8x32xf32, #tpu.memory_space<vmem>>, vector<8x32xf32>,
    } else {
    }
    %c0 = arith.constant 0 : index
    %c0_1 = arith.constant 0 : index
    %3 = vector.load %arg28[%c0, %c0_1] : memref<8x32xf32, #tpu.memory_space<vmem>>, vector<8x32xf32>
    %c0_2 = arith.constant 0 : index
    %c0_3 = arith.constant 0 : index
    %c0_4 = arith.constant 0 : index
    %4 = vector.load %arg4[%c0_2, %c0_3, %c0_4] : memref<1x1x8xf32, #tpu.memory_space<vmem>>, vector<1x1x8xf32>
    %cst = arith.constant 0.000000e+00 : f32
    %5 = vector.broadcast %cst : f32 to vector<8x32xf32>
    %c0_5 = arith.constant 0 : index
    %c0_6 = arith.constant 0 : index
    %c0_7 = arith.constant 0 : index
    %c0_8 = arith.constant 0 : index
    %6 = vector.load %arg7[%c0_5, %c0_6, %c0_7, %c0_8] : memref<1x4x32x8xbf16, #tpu.memory_space<vmem>>, vector<1x1x32x8xbf16>
    %7 = vector.shape_cast %6 : vector<1x1x32x8xbf16> to vector<32x8xbf16>
    %8 = arith.truncf %3 : vector<8x32xf32> to vector<8x32xbf16>
    %cst_9 = arith.constant dense<0.000000e+00> : vector<8x8xf32>
    %9 = tpu.matmul %8, %7, %cst_9 {dimension_numbers = #tpu.dot_dimension_numbers<[1], [0], [0], [1], [0, 0, 1, 1], [], []>} : vector<8x32xbf16>, vector<32x8xbf16>, vector<8x8xf32> -> vector<8x8xf32>
    %c0_10 = arith.constant 0 : index
    %c0_11 = arith.constant 0 : index
    %c0_12 = arith.constant 0 : index
    %c0_13 = arith.constant 0 : index
    %10 = vector.load %arg8[%c0_10, %c0_11, %c0_12, %c0_13] : memref<1x4x1x8xf32, #tpu.memory_space<vmem>>, vector<1x1x1x8xf32>
    %11 = vector.shape_cast %10 : vector<1x1x1x8xf32> to vector<1x8xf32>
    %12 = vector.broadcast %11 : vector<1x8xf32> to vector<8x8xf32>
    %13 = arith.addf %9, %12 : vector<8x8xf32>
    %14 = vector.shape_cast %13 : vector<8x8xf32> to vector<1x8x8xf32>
    %c0_14 = arith.constant 0 : index
    %c0_15 = arith.constant 0 : index
    %c0_16 = arith.constant 0 : index
    %c0_17 = arith.constant 0 : index
    %15 = vector.load %arg9[%c0_14, %c0_15, %c0_16, %c0_17] : memref<1x4x32x8xbf16, #tpu.memory_space<vmem>>, vector<1x1x32x8xbf16>
    %16 = vector.shape_cast %15 : vector<1x1x32x8xbf16> to vector<32x8xbf16>
    %17 = arith.truncf %3 : vector<8x32xf32> to vector<8x32xbf16>
    %cst_18 = arith.constant dense<0.000000e+00> : vector<8x8xf32>
    %18 = tpu.matmul %17, %16, %cst_18 {dimension_numbers = #tpu.dot_dimension_numbers<[1], [0], [0], [1], [0, 0, 1, 1], [], []>} : vector<8x32xbf16>, vector<32x8xbf16>, vector<8x8xf32> -> vector<8x8xf32>
    %c0_19 = arith.constant 0 : index
    %c0_20 = arith.constant 0 : index
    %c0_21 = arith.constant 0 : index
    %c0_22 = arith.constant 0 : index
    %19 = vector.load %arg10[%c0_19, %c0_20, %c0_21, %c0_22] : memref<1x4x1x8xf32, #tpu.memory_space<vmem>>, vector<1x1x1x8xf32>
    %20 = vector.shape_cast %19 : vector<1x1x1x8xf32> to vector<1x8xf32>
    %21 = vector.broadcast %20 : vector<1x8xf32> to vector<8x8xf32>
    %22 = arith.addf %18, %21 : vector<8x8xf32>
    %23 = vector.shape_cast %22 : vector<8x8xf32> to vector<1x8x8xf32>
    %c0_23 = arith.constant 0 : index
    %c0_24 = arith.constant 0 : index
    %c0_25 = arith.constant 0 : index
    %c0_26 = arith.constant 0 : index
    %24 = vector.load %arg11[%c0_23, %c0_24, %c0_25, %c0_26] : memref<1x4x32x8xbf16, #tpu.memory_space<vmem>>, vector<1x1x32x8xbf16>
    %25 = vector.shape_cast %24 : vector<1x1x32x8xbf16> to vector<32x8xbf16>
    %26 = arith.truncf %3 : vector<8x32xf32> to vector<8x32xbf16>
    %cst_27 = arith.constant dense<0.000000e+00> : vector<8x8xf32>
    %27 = tpu.matmul %26, %25, %cst_27 {dimension_numbers = #tpu.dot_dimension_numbers<[1], [0], [0], [1], [0, 0, 1, 1], [], []>} : vector<8x32xbf16>, vector<32x8xbf16>, vector<8x8xf32> -> vector<8x8xf32>
    %c0_28 = arith.constant 0 : index
    %c0_29 = arith.constant 0 : index
    %c0_30 = arith.constant 0 : index
    %c0_31 = arith.constant 0 : index
    %28 = vector.load %arg12[%c0_28, %c0_29, %c0_30, %c0_31] : memref<1x4x1x8xf32, #tpu.memory_space<vmem>>, vector<1x1x1x8xf32>
    %29 = vector.shape_cast %28 : vector<1x1x1x8xf32> to vector<1x8xf32>
    %30 = vector.broadcast %29 : vector<1x8xf32> to vector<8x8xf32>
    %31 = arith.addf %27, %30 : vector<8x8xf32>
    %32 = vector.shape_cast %31 : vector<8x8xf32> to vector<1x8x8xf32>
    "tpu.trace_start"() <{level = 10 : i32, message = "bqd,bkd->bqk"}> : () -> ()
    %cst_32 = arith.constant dense<0.000000e+00> : vector<1x8x8xf32>
    %33 = tpu.matmul %14, %23, %cst_32 {dimension_numbers = #tpu.dot_dimension_numbers<[2], [2], [1], [1], [0, 0, 0, 1, 1, 1], [0], [0]>} : vector<1x8x8xf32>, vector<1x8x8xf32>, vector<1x8x8xf32> -> vector<1x8x8xf32>
    "tpu.trace_stop"() : () -> ()
    %34 = vector.broadcast %4 : vector<1x1x8xf32> to vector<1x8x8xf32>
    %35 = arith.addf %33, %34 : vector<1x8x8xf32>
    %cst_33 = arith.constant dense<0xFF800000> : vector<1x8xf32>
    %36 = vector.multi_reduction <maximumf>, %35, %cst_33 [2] : vector<1x8x8xf32> to vector<1x8xf32>
    %37 = vector.shape_cast %36 : vector<1x8xf32> to vector<1x8x1xf32>
    %38 = vector.broadcast %37 : vector<1x8x1xf32> to vector<1x8x8xf32>
    %39 = arith.subf %35, %38 : vector<1x8x8xf32>
    %40 = math.exp %39 : vector<1x8x8xf32>
    %cst_34 = arith.constant dense<0.000000e+00> : vector<1x8xf32>
    %41 = vector.multi_reduction <add>, %40, %cst_34 [2] : vector<1x8x8xf32> to vector<1x8xf32>
    %42 = vector.shape_cast %41 : vector<1x8xf32> to vector<1x8x1xf32>
    %43 = tpu.reciprocal %42 {approx = true} : vector<1x8x1xf32> -> vector<1x8x1xf32>
    %44 = vector.broadcast %43 : vector<1x8x1xf32> to vector<1x8x8xf32>
    %45 = arith.mulf %40, %44 : vector<1x8x8xf32>
    "tpu.trace_start"() <{level = 10 : i32, message = "bqk,bkd->bqd"}> : () -> ()
    %cst_35 = arith.constant dense<0.000000e+00> : vector<1x8x8xf32>
    %46 = tpu.matmul %45, %32, %cst_35 {dimension_numbers = #tpu.dot_dimension_numbers<[2], [1], [1], [2], [0, 0, 0, 1, 1, 2], [0], [0]>} : vector<1x8x8xf32>, vector<1x8x8xf32>, vector<1x8x8xf32> -> vector<1x8x8xf32>
    "tpu.trace_stop"() : () -> ()
    %47 = vector.shape_cast %46 : vector<1x8x8xf32> to vector<8x8xf32>
    %c0_36 = arith.constant 0 : index
    %c0_37 = arith.constant 0 : index
    %c0_38 = arith.constant 0 : index
    %c0_39 = arith.constant 0 : index
    %48 = vector.load %arg13[%c0_36, %c0_37, %c0_38, %c0_39] : memref<1x4x8x32xbf16, #tpu.memory_space<vmem>>, vector<1x1x8x32xbf16>
    %49 = vector.shape_cast %48 : vector<1x1x8x32xbf16> to vector<8x32xbf16>
    %50 = arith.truncf %47 : vector<8x8xf32> to vector<8x8xbf16>
    %cst_40 = arith.constant dense<0.000000e+00> : vector<8x32xf32>
    %51 = tpu.matmul %50, %49, %cst_40 {dimension_numbers = #tpu.dot_dimension_numbers<[1], [0], [0], [1], [0, 0, 1, 1], [], []>} : vector<8x8xbf16>, vector<8x32xbf16>, vector<8x32xf32> -> vector<8x32xf32>
    %52 = arith.addf %5, %51 : vector<8x32xf32>
    %c0_41 = arith.constant 0 : index
    %c1 = arith.constant 1 : index
    %c0_42 = arith.constant 0 : index
    %c0_43 = arith.constant 0 : index
    %53 = vector.load %arg7[%c0_41, %c1, %c0_42, %c0_43] : memref<1x4x32x8xbf16, #tpu.memory_space<vmem>>, vector<1x1x32x8xbf16>
    %54 = vector.shape_cast %53 : vector<1x1x32x8xbf16> to vector<32x8xbf16>
    %55 = arith.truncf %3 : vector<8x32xf32> to vector<8x32xbf16>
    %cst_44 = arith.constant dense<0.000000e+00> : vector<8x8xf32>
    %56 = tpu.matmul %55, %54, %cst_44 {dimension_numbers = #tpu.dot_dimension_numbers<[1], [0], [0], [1], [0, 0, 1, 1], [], []>} : vector<8x32xbf16>, vector<32x8xbf16>, vector<8x8xf32> -> vector<8x8xf32>
    %c0_45 = arith.constant 0 : index
    %c1_46 = arith.constant 1 : index
    %c0_47 = arith.constant 0 : index
    %c0_48 = arith.constant 0 : index
    %57 = vector.load %arg8[%c0_45, %c1_46, %c0_47, %c0_48] : memref<1x4x1x8xf32, #tpu.memory_space<vmem>>, vector<1x1x1x8xf32>
    %58 = vector.shape_cast %57 : vector<1x1x1x8xf32> to vector<1x8xf32>
    %59 = vector.broadcast %58 : vector<1x8xf32> to vector<8x8xf32>
    %60 = arith.addf %56, %59 : vector<8x8xf32>
    %61 = vector.shape_cast %60 : vector<8x8xf32> to vector<1x8x8xf32>
    %c0_49 = arith.constant 0 : index
    %c1_50 = arith.constant 1 : index
    %c0_51 = arith.constant 0 : index
    %c0_52 = arith.constant 0 : index
    %62 = vector.load %arg9[%c0_49, %c1_50, %c0_51, %c0_52] : memref<1x4x32x8xbf16, #tpu.memory_space<vmem>>, vector<1x1x32x8xbf16>
    %63 = vector.shape_cast %62 : vector<1x1x32x8xbf16> to vector<32x8xbf16>
    %64 = arith.truncf %3 : vector<8x32xf32> to vector<8x32xbf16>
    %cst_53 = arith.constant dense<0.000000e+00> : vector<8x8xf32>
    %65 = tpu.matmul %64, %63, %cst_53 {dimension_numbers = #tpu.dot_dimension_numbers<[1], [0], [0], [1], [0, 0, 1, 1], [], []>} : vector<8x32xbf16>, vector<32x8xbf16>, vector<8x8xf32> -> vector<8x8xf32>
    %c0_54 = arith.constant 0 : index
    %c1_55 = arith.constant 1 : index
    %c0_56 = arith.constant 0 : index
    %c0_57 = arith.constant 0 : index
    %66 = vector.load %arg10[%c0_54, %c1_55, %c0_56, %c0_57] : memref<1x4x1x8xf32, #tpu.memory_space<vmem>>, vector<1x1x1x8xf32>
    %67 = vector.shape_cast %66 : vector<1x1x1x8xf32> to vector<1x8xf32>
    %68 = vector.broadcast %67 : vector<1x8xf32> to vector<8x8xf32>
    %69 = arith.addf %65, %68 : vector<8x8xf32>
    %70 = vector.shape_cast %69 : vector<8x8xf32> to vector<1x8x8xf32>
    %c0_58 = arith.constant 0 : index
    %c1_59 = arith.constant 1 : index
    %c0_60 = arith.constant 0 : index
    %c0_61 = arith.constant 0 : index
    %71 = vector.load %arg11[%c0_58, %c1_59, %c0_60, %c0_61] : memref<1x4x32x8xbf16, #tpu.memory_space<vmem>>, vector<1x1x32x8xbf16>
    %72 = vector.shape_cast %71 : vector<1x1x32x8xbf16> to vector<32x8xbf16>
    %73 = arith.truncf %3 : vector<8x32xf32> to vector<8x32xbf16>
    %cst_62 = arith.constant dense<0.000000e+00> : vector<8x8xf32>
    %74 = tpu.matmul %73, %72, %cst_62 {dimension_numbers = #tpu.dot_dimension_numbers<[1], [0], [0], [1], [0, 0, 1, 1], [], []>} : vector<8x32xbf16>, vector<32x8xbf16>, vector<8x8xf32> -> vector<8x8xf32>
    %c0_63 = arith.constant 0 : index
    %c1_64 = arith.constant 1 : index
    %c0_65 = arith.constant 0 : index
    %c0_66 = arith.constant 0 : index
    %75 = vector.load %arg12[%c0_63, %c1_64, %c0_65, %c0_66] : memref<1x4x1x8xf32, #tpu.memory_space<vmem>>, vector<1x1x1x8xf32>
    %76 = vector.shape_cast %75 : vector<1x1x1x8xf32> to vector<1x8xf32>
    %77 = vector.broadcast %76 : vector<1x8xf32> to vector<8x8xf32>
    %78 = arith.addf %74, %77 : vector<8x8xf32>
    %79 = vector.shape_cast %78 : vector<8x8xf32> to vector<1x8x8xf32>
    "tpu.trace_start"() <{level = 10 : i32, message = "bqd,bkd->bqk"}> : () -> ()
    %cst_67 = arith.constant dense<0.000000e+00> : vector<1x8x8xf32>
    %80 = tpu.matmul %61, %70, %cst_67 {dimension_numbers = #tpu.dot_dimension_numbers<[2], [2], [1], [1], [0, 0, 0, 1, 1, 1], [0], [0]>} : vector<1x8x8xf32>, vector<1x8x8xf32>, vector<1x8x8xf32> -> vector<1x8x8xf32>
    "tpu.trace_stop"() : () -> ()
    %81 = vector.broadcast %4 : vector<1x1x8xf32> to vector<1x8x8xf32>
    %82 = arith.addf %80, %81 : vector<1x8x8xf32>
    %cst_68 = arith.constant dense<0xFF800000> : vector<1x8xf32>
    %83 = vector.multi_reduction <maximumf>, %82, %cst_68 [2] : vector<1x8x8xf32> to vector<1x8xf32>
    %84 = vector.shape_cast %83 : vector<1x8xf32> to vector<1x8x1xf32>
    %85 = vector.broadcast %84 : vector<1x8x1xf32> to vector<1x8x8xf32>
    %86 = arith.subf %82, %85 : vector<1x8x8xf32>
    %87 = math.exp %86 : vector<1x8x8xf32>
    %cst_69 = arith.constant dense<0.000000e+00> : vector<1x8xf32>
    %88 = vector.multi_reduction <add>, %87, %cst_69 [2] : vector<1x8x8xf32> to vector<1x8xf32>
    %89 = vector.shape_cast %88 : vector<1x8xf32> to vector<1x8x1xf32>
    %90 = tpu.reciprocal %89 {approx = true} : vector<1x8x1xf32> -> vector<1x8x1xf32>
    %91 = vector.broadcast %90 : vector<1x8x1xf32> to vector<1x8x8xf32>
    %92 = arith.mulf %87, %91 : vector<1x8x8xf32>
    "tpu.trace_start"() <{level = 10 : i32, message = "bqk,bkd->bqd"}> : () -> ()
    %cst_70 = arith.constant dense<0.000000e+00> : vector<1x8x8xf32>
    %93 = tpu.matmul %92, %79, %cst_70 {dimension_numbers = #tpu.dot_dimension_numbers<[2], [1], [1], [2], [0, 0, 0, 1, 1, 2], [0], [0]>} : vector<1x8x8xf32>, vector<1x8x8xf32>, vector<1x8x8xf32> -> vector<1x8x8xf32>
    "tpu.trace_stop"() : () -> ()
    %94 = vector.shape_cast %93 : vector<1x8x8xf32> to vector<8x8xf32>
    %c0_71 = arith.constant 0 : index
    %c1_72 = arith.constant 1 : index
    %c0_73 = arith.constant 0 : index
    %c0_74 = arith.constant 0 : index
    %95 = vector.load %arg13[%c0_71, %c1_72, %c0_73, %c0_74] : memref<1x4x8x32xbf16, #tpu.memory_space<vmem>>, vector<1x1x8x32xbf16>
    %96 = vector.shape_cast %95 : vector<1x1x8x32xbf16> to vector<8x32xbf16>
    %97 = arith.truncf %94 : vector<8x8xf32> to vector<8x8xbf16>
    %cst_75 = arith.constant dense<0.000000e+00> : vector<8x32xf32>
    %98 = tpu.matmul %97, %96, %cst_75 {dimension_numbers = #tpu.dot_dimension_numbers<[1], [0], [0], [1], [0, 0, 1, 1], [], []>} : vector<8x8xbf16>, vector<8x32xbf16>, vector<8x32xf32> -> vector<8x32xf32>
    %99 = arith.addf %52, %98 : vector<8x32xf32>
    %c0_76 = arith.constant 0 : index
    %c2 = arith.constant 2 : index
    %c0_77 = arith.constant 0 : index
    %c0_78 = arith.constant 0 : index
    %100 = vector.load %arg7[%c0_76, %c2, %c0_77, %c0_78] : memref<1x4x32x8xbf16, #tpu.memory_space<vmem>>, vector<1x1x32x8xbf16>
    %101 = vector.shape_cast %100 : vector<1x1x32x8xbf16> to vector<32x8xbf16>
    %102 = arith.truncf %3 : vector<8x32xf32> to vector<8x32xbf16>
    %cst_79 = arith.constant dense<0.000000e+00> : vector<8x8xf32>
    %103 = tpu.matmul %102, %101, %cst_79 {dimension_numbers = #tpu.dot_dimension_numbers<[1], [0], [0], [1], [0, 0, 1, 1], [], []>} : vector<8x32xbf16>, vector<32x8xbf16>, vector<8x8xf32> -> vector<8x8xf32>
    %c0_80 = arith.constant 0 : index
    %c2_81 = arith.constant 2 : index
    %c0_82 = arith.constant 0 : index
    %c0_83 = arith.constant 0 : index
    %104 = vector.load %arg8[%c0_80, %c2_81, %c0_82, %c0_83] : memref<1x4x1x8xf32, #tpu.memory_space<vmem>>, vector<1x1x1x8xf32>
    %105 = vector.shape_cast %104 : vector<1x1x1x8xf32> to vector<1x8xf32>
    %106 = vector.broadcast %105 : vector<1x8xf32> to vector<8x8xf32>
    %107 = arith.addf %103, %106 : vector<8x8xf32>
    %108 = vector.shape_cast %107 : vector<8x8xf32> to vector<1x8x8xf32>
    %c0_84 = arith.constant 0 : index
    %c2_85 = arith.constant 2 : index
    %c0_86 = arith.constant 0 : index
    %c0_87 = arith.constant 0 : index
    %109 = vector.load %arg9[%c0_84, %c2_85, %c0_86, %c0_87] : memref<1x4x32x8xbf16, #tpu.memory_space<vmem>>, vector<1x1x32x8xbf16>
    %110 = vector.shape_cast %109 : vector<1x1x32x8xbf16> to vector<32x8xbf16>
    %111 = arith.truncf %3 : vector<8x32xf32> to vector<8x32xbf16>
    %cst_88 = arith.constant dense<0.000000e+00> : vector<8x8xf32>
    %112 = tpu.matmul %111, %110, %cst_88 {dimension_numbers = #tpu.dot_dimension_numbers<[1], [0], [0], [1], [0, 0, 1, 1], [], []>} : vector<8x32xbf16>, vector<32x8xbf16>, vector<8x8xf32> -> vector<8x8xf32>
    %c0_89 = arith.constant 0 : index
    %c2_90 = arith.constant 2 : index
    %c0_91 = arith.constant 0 : index
    %c0_92 = arith.constant 0 : index
    %113 = vector.load %arg10[%c0_89, %c2_90, %c0_91, %c0_92] : memref<1x4x1x8xf32, #tpu.memory_space<vmem>>, vector<1x1x1x8xf32>
    %114 = vector.shape_cast %113 : vector<1x1x1x8xf32> to vector<1x8xf32>
    %115 = vector.broadcast %114 : vector<1x8xf32> to vector<8x8xf32>
    %116 = arith.addf %112, %115 : vector<8x8xf32>
    %117 = vector.shape_cast %116 : vector<8x8xf32> to vector<1x8x8xf32>
    %c0_93 = arith.constant 0 : index
    %c2_94 = arith.constant 2 : index
    %c0_95 = arith.constant 0 : index
    %c0_96 = arith.constant 0 : index
    %118 = vector.load %arg11[%c0_93, %c2_94, %c0_95, %c0_96] : memref<1x4x32x8xbf16, #tpu.memory_space<vmem>>, vector<1x1x32x8xbf16>
    %119 = vector.shape_cast %118 : vector<1x1x32x8xbf16> to vector<32x8xbf16>
    %120 = arith.truncf %3 : vector<8x32xf32> to vector<8x32xbf16>
    %cst_97 = arith.constant dense<0.000000e+00> : vector<8x8xf32>
    %121 = tpu.matmul %120, %119, %cst_97 {dimension_numbers = #tpu.dot_dimension_numbers<[1], [0], [0], [1], [0, 0, 1, 1], [], []>} : vector<8x32xbf16>, vector<32x8xbf16>, vector<8x8xf32> -> vector<8x8xf32>
    %c0_98 = arith.constant 0 : index
    %c2_99 = arith.constant 2 : index
    %c0_100 = arith.constant 0 : index
    %c0_101 = arith.constant 0 : index
    %122 = vector.load %arg12[%c0_98, %c2_99, %c0_100, %c0_101] : memref<1x4x1x8xf32, #tpu.memory_space<vmem>>, vector<1x1x1x8xf32>
    %123 = vector.shape_cast %122 : vector<1x1x1x8xf32> to vector<1x8xf32>
    %124 = vector.broadcast %123 : vector<1x8xf32> to vector<8x8xf32>
    %125 = arith.addf %121, %124 : vector<8x8xf32>
    %126 = vector.shape_cast %125 : vector<8x8xf32> to vector<1x8x8xf32>
    "tpu.trace_start"() <{level = 10 : i32, message = "bqd,bkd->bqk"}> : () -> ()
    %cst_102 = arith.constant dense<0.000000e+00> : vector<1x8x8xf32>
    %127 = tpu.matmul %108, %117, %cst_102 {dimension_numbers = #tpu.dot_dimension_numbers<[2], [2], [1], [1], [0, 0, 0, 1, 1, 1], [0], [0]>} : vector<1x8x8xf32>, vector<1x8x8xf32>, vector<1x8x8xf32> -> vector<1x8x8xf32>
    "tpu.trace_stop"() : () -> ()
    %128 = vector.broadcast %4 : vector<1x1x8xf32> to vector<1x8x8xf32>
    %129 = arith.addf %127, %128 : vector<1x8x8xf32>
    %cst_103 = arith.constant dense<0xFF800000> : vector<1x8xf32>
    %130 = vector.multi_reduction <maximumf>, %129, %cst_103 [2] : vector<1x8x8xf32> to vector<1x8xf32>
    %131 = vector.shape_cast %130 : vector<1x8xf32> to vector<1x8x1xf32>
    %132 = vector.broadcast %131 : vector<1x8x1xf32> to vector<1x8x8xf32>
    %133 = arith.subf %129, %132 : vector<1x8x8xf32>
    %134 = math.exp %133 : vector<1x8x8xf32>
    %cst_104 = arith.constant dense<0.000000e+00> : vector<1x8xf32>
    %135 = vector.multi_reduction <add>, %134, %cst_104 [2] : vector<1x8x8xf32> to vector<1x8xf32>
    %136 = vector.shape_cast %135 : vector<1x8xf32> to vector<1x8x1xf32>
    %137 = tpu.reciprocal %136 {approx = true} : vector<1x8x1xf32> -> vector<1x8x1xf32>
    %138 = vector.broadcast %137 : vector<1x8x1xf32> to vector<1x8x8xf32>
    %139 = arith.mulf %134, %138 : vector<1x8x8xf32>
    "tpu.trace_start"() <{level = 10 : i32, message = "bqk,bkd->bqd"}> : () -> ()
    %cst_105 = arith.constant dense<0.000000e+00> : vector<1x8x8xf32>
    %140 = tpu.matmul %139, %126, %cst_105 {dimension_numbers = #tpu.dot_dimension_numbers<[2], [1], [1], [2], [0, 0, 0, 1, 1, 2], [0], [0]>} : vector<1x8x8xf32>, vector<1x8x8xf32>, vector<1x8x8xf32> -> vector<1x8x8xf32>
    "tpu.trace_stop"() : () -> ()
    %141 = vector.shape_cast %140 : vector<1x8x8xf32> to vector<8x8xf32>
    %c0_106 = arith.constant 0 : index
    %c2_107 = arith.constant 2 : index
    %c0_108 = arith.constant 0 : index
    %c0_109 = arith.constant 0 : index
    %142 = vector.load %arg13[%c0_106, %c2_107, %c0_108, %c0_109] : memref<1x4x8x32xbf16, #tpu.memory_space<vmem>>, vector<1x1x8x32xbf16>
    %143 = vector.shape_cast %142 : vector<1x1x8x32xbf16> to vector<8x32xbf16>
    %144 = arith.truncf %141 : vector<8x8xf32> to vector<8x8xbf16>
    %cst_110 = arith.constant dense<0.000000e+00> : vector<8x32xf32>
    %145 = tpu.matmul %144, %143, %cst_110 {dimension_numbers = #tpu.dot_dimension_numbers<[1], [0], [0], [1], [0, 0, 1, 1], [], []>} : vector<8x8xbf16>, vector<8x32xbf16>, vector<8x32xf32> -> vector<8x32xf32>
    %146 = arith.addf %99, %145 : vector<8x32xf32>
    %c0_111 = arith.constant 0 : index
    %c3 = arith.constant 3 : index
    %c0_112 = arith.constant 0 : index
    %c0_113 = arith.constant 0 : index
    %147 = vector.load %arg7[%c0_111, %c3, %c0_112, %c0_113] : memref<1x4x32x8xbf16, #tpu.memory_space<vmem>>, vector<1x1x32x8xbf16>
    %148 = vector.shape_cast %147 : vector<1x1x32x8xbf16> to vector<32x8xbf16>
    %149 = arith.truncf %3 : vector<8x32xf32> to vector<8x32xbf16>
    %cst_114 = arith.constant dense<0.000000e+00> : vector<8x8xf32>
    %150 = tpu.matmul %149, %148, %cst_114 {dimension_numbers = #tpu.dot_dimension_numbers<[1], [0], [0], [1], [0, 0, 1, 1], [], []>} : vector<8x32xbf16>, vector<32x8xbf16>, vector<8x8xf32> -> vector<8x8xf32>
    %c0_115 = arith.constant 0 : index
    %c3_116 = arith.constant 3 : index
    %c0_117 = arith.constant 0 : index
    %c0_118 = arith.constant 0 : index
    %151 = vector.load %arg8[%c0_115, %c3_116, %c0_117, %c0_118] : memref<1x4x1x8xf32, #tpu.memory_space<vmem>>, vector<1x1x1x8xf32>
    %152 = vector.shape_cast %151 : vector<1x1x1x8xf32> to vector<1x8xf32>
    %153 = vector.broadcast %152 : vector<1x8xf32> to vector<8x8xf32>
    %154 = arith.addf %150, %153 : vector<8x8xf32>
    %155 = vector.shape_cast %154 : vector<8x8xf32> to vector<1x8x8xf32>
    %c0_119 = arith.constant 0 : index
    %c3_120 = arith.constant 3 : index
    %c0_121 = arith.constant 0 : index
    %c0_122 = arith.constant 0 : index
    %156 = vector.load %arg9[%c0_119, %c3_120, %c0_121, %c0_122] : memref<1x4x32x8xbf16, #tpu.memory_space<vmem>>, vector<1x1x32x8xbf16>
    %157 = vector.shape_cast %156 : vector<1x1x32x8xbf16> to vector<32x8xbf16>
    %158 = arith.truncf %3 : vector<8x32xf32> to vector<8x32xbf16>
    %cst_123 = arith.constant dense<0.000000e+00> : vector<8x8xf32>
    %159 = tpu.matmul %158, %157, %cst_123 {dimension_numbers = #tpu.dot_dimension_numbers<[1], [0], [0], [1], [0, 0, 1, 1], [], []>} : vector<8x32xbf16>, vector<32x8xbf16>, vector<8x8xf32> -> vector<8x8xf32>
    %c0_124 = arith.constant 0 : index
    %c3_125 = arith.constant 3 : index
    %c0_126 = arith.constant 0 : index
    %c0_127 = arith.constant 0 : index
    %160 = vector.load %arg10[%c0_124, %c3_125, %c0_126, %c0_127] : memref<1x4x1x8xf32, #tpu.memory_space<vmem>>, vector<1x1x1x8xf32>
    %161 = vector.shape_cast %160 : vector<1x1x1x8xf32> to vector<1x8xf32>
    %162 = vector.broadcast %161 : vector<1x8xf32> to vector<8x8xf32>
    %163 = arith.addf %159, %162 : vector<8x8xf32>
    %164 = vector.shape_cast %163 : vector<8x8xf32> to vector<1x8x8xf32>
    %c0_128 = arith.constant 0 : index
    %c3_129 = arith.constant 3 : index
    %c0_130 = arith.constant 0 : index
    %c0_131 = arith.constant 0 : index
    %165 = vector.load %arg11[%c0_128, %c3_129, %c0_130, %c0_131] : memref<1x4x32x8xbf16, #tpu.memory_space<vmem>>, vector<1x1x32x8xbf16>
    %166 = vector.shape_cast %165 : vector<1x1x32x8xbf16> to vector<32x8xbf16>
    %167 = arith.truncf %3 : vector<8x32xf32> to vector<8x32xbf16>
    %cst_132 = arith.constant dense<0.000000e+00> : vector<8x8xf32>
    %168 = tpu.matmul %167, %166, %cst_132 {dimension_numbers = #tpu.dot_dimension_numbers<[1], [0], [0], [1], [0, 0, 1, 1], [], []>} : vector<8x32xbf16>, vector<32x8xbf16>, vector<8x8xf32> -> vector<8x8xf32>
    %c0_133 = arith.constant 0 : index
    %c3_134 = arith.constant 3 : index
    %c0_135 = arith.constant 0 : index
    %c0_136 = arith.constant 0 : index
    %169 = vector.load %arg12[%c0_133, %c3_134, %c0_135, %c0_136] : memref<1x4x1x8xf32, #tpu.memory_space<vmem>>, vector<1x1x1x8xf32>
    %170 = vector.shape_cast %169 : vector<1x1x1x8xf32> to vector<1x8xf32>
    %171 = vector.broadcast %170 : vector<1x8xf32> to vector<8x8xf32>
    %172 = arith.addf %168, %171 : vector<8x8xf32>
    %173 = vector.shape_cast %172 : vector<8x8xf32> to vector<1x8x8xf32>
    "tpu.trace_start"() <{level = 10 : i32, message = "bqd,bkd->bqk"}> : () -> ()
    %cst_137 = arith.constant dense<0.000000e+00> : vector<1x8x8xf32>
    %174 = tpu.matmul %155, %164, %cst_137 {dimension_numbers = #tpu.dot_dimension_numbers<[2], [2], [1], [1], [0, 0, 0, 1, 1, 1], [0], [0]>} : vector<1x8x8xf32>, vector<1x8x8xf32>, vector<1x8x8xf32> -> vector<1x8x8xf32>
    "tpu.trace_stop"() : () -> ()
    %175 = vector.broadcast %4 : vector<1x1x8xf32> to vector<1x8x8xf32>
    %176 = arith.addf %174, %175 : vector<1x8x8xf32>
    %cst_138 = arith.constant dense<0xFF800000> : vector<1x8xf32>
    %177 = vector.multi_reduction <maximumf>, %176, %cst_138 [2] : vector<1x8x8xf32> to vector<1x8xf32>
    %178 = vector.shape_cast %177 : vector<1x8xf32> to vector<1x8x1xf32>
    %179 = vector.broadcast %178 : vector<1x8x1xf32> to vector<1x8x8xf32>
    %180 = arith.subf %176, %179 : vector<1x8x8xf32>
    %181 = math.exp %180 : vector<1x8x8xf32>
    %cst_139 = arith.constant dense<0.000000e+00> : vector<1x8xf32>
    %182 = vector.multi_reduction <add>, %181, %cst_139 [2] : vector<1x8x8xf32> to vector<1x8xf32>
    %183 = vector.shape_cast %182 : vector<1x8xf32> to vector<1x8x1xf32>
    %184 = tpu.reciprocal %183 {approx = true} : vector<1x8x1xf32> -> vector<1x8x1xf32>
    %185 = vector.broadcast %184 : vector<1x8x1xf32> to vector<1x8x8xf32>
    %186 = arith.mulf %181, %185 : vector<1x8x8xf32>
    "tpu.trace_start"() <{level = 10 : i32, message = "bqk,bkd->bqd"}> : () -> ()
    %cst_140 = arith.constant dense<0.000000e+00> : vector<1x8x8xf32>
    %187 = tpu.matmul %186, %173, %cst_140 {dimension_numbers = #tpu.dot_dimension_numbers<[2], [1], [1], [2], [0, 0, 0, 1, 1, 2], [0], [0]>} : vector<1x8x8xf32>, vector<1x8x8xf32>, vector<1x8x8xf32> -> vector<1x8x8xf32>
    "tpu.trace_stop"() : () -> ()
    %188 = vector.shape_cast %187 : vector<1x8x8xf32> to vector<8x8xf32>
    %c0_141 = arith.constant 0 : index
    %c3_142 = arith.constant 3 : index
    %c0_143 = arith.constant 0 : index
    %c0_144 = arith.constant 0 : index
    %189 = vector.load %arg13[%c0_141, %c3_142, %c0_143, %c0_144] : memref<1x4x8x32xbf16, #tpu.memory_space<vmem>>, vector<1x1x8x32xbf16>
    %190 = vector.shape_cast %189 : vector<1x1x8x32xbf16> to vector<8x32xbf16>
    %191 = arith.truncf %188 : vector<8x8xf32> to vector<8x8xbf16>
    %cst_145 = arith.constant dense<0.000000e+00> : vector<8x32xf32>
    %192 = tpu.matmul %191, %190, %cst_145 {dimension_numbers = #tpu.dot_dimension_numbers<[1], [0], [0], [1], [0, 0, 1, 1], [], []>} : vector<8x8xbf16>, vector<8x32xbf16>, vector<8x32xf32> -> vector<8x32xf32>
    %193 = arith.addf %146, %192 : vector<8x32xf32>
    %c0_146 = arith.constant 0 : index
    %c0_147 = arith.constant 0 : index
    %c0_148 = arith.constant 0 : index
    %194 = vector.load %arg14[%c0_146, %c0_147, %c0_148] : memref<1x1x32xf32, #tpu.memory_space<vmem>>, vector<1x1x32xf32>
    %195 = vector.shape_cast %194 : vector<1x1x32xf32> to vector<1x32xf32>
    %196 = vector.broadcast %195 : vector<1x32xf32> to vector<8x32xf32>
    %197 = arith.addf %193, %196 : vector<8x32xf32>
    %198 = arith.addf %3, %197 : vector<8x32xf32>
    %c0_149 = arith.constant 0 : index
    %c0_150 = arith.constant 0 : index
    %c0_151 = arith.constant 0 : index
    %199 = vector.load %arg15[%c0_149, %c0_150, %c0_151] : memref<1x1x32xf32, #tpu.memory_space<vmem>>, vector<1x1x32xf32>
    %200 = vector.shape_cast %199 : vector<1x1x32xf32> to vector<1x32xf32>
    %c0_152 = arith.constant 0 : index
    %c0_153 = arith.constant 0 : index
    %c0_154 = arith.constant 0 : index
    %201 = vector.load %arg16[%c0_152, %c0_153, %c0_154] : memref<1x1x32xf32, #tpu.memory_space<vmem>>, vector<1x1x32xf32>
    %202 = vector.shape_cast %201 : vector<1x1x32xf32> to vector<1x32xf32>
    %cst_155 = arith.constant dense<0.000000e+00> : vector<8xf32>
    %203 = vector.multi_reduction <add>, %198, %cst_155 [1] : vector<8x32xf32> to vector<8xf32>
    %204 = vector.shape_cast %203 : vector<8xf32> to vector<8x1xf32>
    %cst_156 = arith.constant 3.200000e+01 : f32
    %205 = vector.broadcast %cst_156 : f32 to vector<8x1xf32>
    %206 = arith.divf %204, %205 : vector<8x1xf32>
    %207 = vector.broadcast %206 : vector<8x1xf32> to vector<8x32xf32>
    %208 = arith.subf %198, %207 : vector<8x32xf32>
    %209 = arith.mulf %208, %208 : vector<8x32xf32>
    %cst_157 = arith.constant dense<0.000000e+00> : vector<8xf32>
    %210 = vector.multi_reduction <add>, %209, %cst_157 [1] : vector<8x32xf32> to vector<8xf32>
    %211 = vector.shape_cast %210 : vector<8xf32> to vector<8x1xf32>
    %cst_158 = arith.constant 3.200000e+01 : f32
    %212 = vector.broadcast %cst_158 : f32 to vector<8x1xf32>
    %213 = arith.divf %211, %212 : vector<8x1xf32>
    %214 = vector.broadcast %206 : vector<8x1xf32> to vector<8x32xf32>
    %215 = arith.subf %198, %214 : vector<8x32xf32>
    %cst_159 = arith.constant 9.99999974E-6 : f32
    %216 = vector.broadcast %cst_159 : f32 to vector<8x1xf32>
    %217 = arith.addf %213, %216 : vector<8x1xf32>
    %218 = math.rsqrt %217 : vector<8x1xf32>
    %219 = vector.broadcast %218 : vector<8x1xf32> to vector<8x32xf32>
    %220 = arith.mulf %215, %219 : vector<8x32xf32>
    %221 = vector.broadcast %200 : vector<1x32xf32> to vector<8x32xf32>
    %222 = arith.mulf %220, %221 : vector<8x32xf32>
    %223 = vector.broadcast %202 : vector<1x32xf32> to vector<8x32xf32>
    %224 = arith.addf %222, %223 : vector<8x32xf32>
    %c0_160 = arith.constant 0 : index
    %c0_161 = arith.constant 0 : index
    %c0_162 = arith.constant 0 : index
    %225 = vector.load %arg17[%c0_160, %c0_161, %c0_162] : memref<1x32x64xbf16, #tpu.memory_space<vmem>>, vector<1x32x64xbf16>
    %226 = vector.shape_cast %225 : vector<1x32x64xbf16> to vector<32x64xbf16>
    %227 = arith.truncf %224 : vector<8x32xf32> to vector<8x32xbf16>
    %cst_163 = arith.constant dense<0.000000e+00> : vector<8x64xf32>
    %228 = tpu.matmul %227, %226, %cst_163 {dimension_numbers = #tpu.dot_dimension_numbers<[1], [0], [0], [1], [0, 0, 1, 1], [], []>} : vector<8x32xbf16>, vector<32x64xbf16>, vector<8x64xf32> -> vector<8x64xf32>
    %c0_164 = arith.constant 0 : index
    %c0_165 = arith.constant 0 : index
    %c0_166 = arith.constant 0 : index
    %229 = vector.load %arg18[%c0_164, %c0_165, %c0_166] : memref<1x1x64xf32, #tpu.memory_space<vmem>>, vector<1x1x64xf32>
    %230 = vector.shape_cast %229 : vector<1x1x64xf32> to vector<1x64xf32>
    %231 = vector.broadcast %230 : vector<1x64xf32> to vector<8x64xf32>
    %232 = arith.addf %228, %231 : vector<8x64xf32>
    %cst_167 = arith.constant 0.000000e+00 : f32
    %233 = vector.broadcast %cst_167 : f32 to vector<8x64xf32>
    %234 = arith.maximumf %232, %233 : vector<8x64xf32>
    %c0_168 = arith.constant 0 : index
    %c0_169 = arith.constant 0 : index
    %c0_170 = arith.constant 0 : index
    %235 = vector.load %arg19[%c0_168, %c0_169, %c0_170] : memref<1x64x32xbf16, #tpu.memory_space<vmem>>, vector<1x64x32xbf16>
    %236 = vector.shape_cast %235 : vector<1x64x32xbf16> to vector<64x32xbf16>
    %237 = arith.truncf %234 : vector<8x64xf32> to vector<8x64xbf16>
    %cst_171 = arith.constant dense<0.000000e+00> : vector<8x32xf32>
    %238 = tpu.matmul %237, %236, %cst_171 {dimension_numbers = #tpu.dot_dimension_numbers<[1], [0], [0], [1], [0, 0, 1, 1], [], []>} : vector<8x64xbf16>, vector<64x32xbf16>, vector<8x32xf32> -> vector<8x32xf32>
    %239 = arith.addf %224, %238 : vector<8x32xf32>
    %c0_172 = arith.constant 0 : index
    %c0_173 = arith.constant 0 : index
    %c0_174 = arith.constant 0 : index
    %240 = vector.load %arg20[%c0_172, %c0_173, %c0_174] : memref<1x1x32xf32, #tpu.memory_space<vmem>>, vector<1x1x32xf32>
    %241 = vector.shape_cast %240 : vector<1x1x32xf32> to vector<1x32xf32>
    %242 = vector.broadcast %241 : vector<1x32xf32> to vector<8x32xf32>
    %243 = arith.addf %239, %242 : vector<8x32xf32>
    %c0_175 = arith.constant 0 : index
    %c0_176 = arith.constant 0 : index
    %c0_177 = arith.constant 0 : index
    %244 = vector.load %arg21[%c0_175, %c0_176, %c0_177] : memref<1x1x32xf32, #tpu.memory_space<vmem>>, vector<1x1x32xf32>
    %245 = vector.shape_cast %244 : vector<1x1x32xf32> to vector<1x32xf32>
    %c0_178 = arith.constant 0 : index
    %c0_179 = arith.constant 0 : index
    %c0_180 = arith.constant 0 : index
    %246 = vector.load %arg22[%c0_178, %c0_179, %c0_180] : memref<1x1x32xf32, #tpu.memory_space<vmem>>, vector<1x1x32xf32>
    %247 = vector.shape_cast %246 : vector<1x1x32xf32> to vector<1x32xf32>
    %cst_181 = arith.constant dense<0.000000e+00> : vector<8xf32>
    %248 = vector.multi_reduction <add>, %243, %cst_181 [1] : vector<8x32xf32> to vector<8xf32>
    %249 = vector.shape_cast %248 : vector<8xf32> to vector<8x1xf32>
    %cst_182 = arith.constant 3.200000e+01 : f32
    %250 = vector.broadcast %cst_182 : f32 to vector<8x1xf32>
    %251 = arith.divf %249, %250 : vector<8x1xf32>
    %252 = vector.broadcast %251 : vector<8x1xf32> to vector<8x32xf32>
    %253 = arith.subf %243, %252 : vector<8x32xf32>
    %254 = arith.mulf %253, %253 : vector<8x32xf32>
    %cst_183 = arith.constant dense<0.000000e+00> : vector<8xf32>
    %255 = vector.multi_reduction <add>, %254, %cst_183 [1] : vector<8x32xf32> to vector<8xf32>
    %256 = vector.shape_cast %255 : vector<8xf32> to vector<8x1xf32>
    %cst_184 = arith.constant 3.200000e+01 : f32
    %257 = vector.broadcast %cst_184 : f32 to vector<8x1xf32>
    %258 = arith.divf %256, %257 : vector<8x1xf32>
    %259 = vector.broadcast %251 : vector<8x1xf32> to vector<8x32xf32>
    %260 = arith.subf %243, %259 : vector<8x32xf32>
    %cst_185 = arith.constant 9.99999974E-6 : f32
    %261 = vector.broadcast %cst_185 : f32 to vector<8x1xf32>
    %262 = arith.addf %258, %261 : vector<8x1xf32>
    %263 = math.rsqrt %262 : vector<8x1xf32>
    %264 = vector.broadcast %263 : vector<8x1xf32> to vector<8x32xf32>
    %265 = arith.mulf %260, %264 : vector<8x32xf32>
    %266 = vector.broadcast %245 : vector<1x32xf32> to vector<8x32xf32>
    %267 = arith.mulf %265, %266 : vector<8x32xf32>
    %268 = vector.broadcast %247 : vector<1x32xf32> to vector<8x32xf32>
    %269 = arith.addf %267, %268 : vector<8x32xf32>
    %c0_186 = arith.constant 0 : index
    %c0_187 = arith.constant 0 : index
    %270 = vector.load %arg28[%c0_186, %c0_187] : memref<8x32xf32, #tpu.memory_space<vmem>>, vector<8x32xf32>
    tpu.vector_store %arg28[%c0_186, %c0_187], %269 {strides = array<i32>} : memref<8x32xf32, #tpu.memory_space<vmem>>, vector<8x32xf32>,
    %c1_i32 = arith.constant 1 : i32
    %271 = arith.cmpi eq, %arg1, %c1_i32 : i32
    %272 = arith.extui %271 : i1 to i32
    %c0_i32_188 = arith.constant 0 : i32
    %273 = arith.cmpi ne, %272, %c0_i32_188 : i32
    scf.if %273 {
      %274 = vector.shape_cast %269 : vector<8x32xf32> to vector<1x8x32xf32>
      %275 = vector.extract_strided_slice %274 {offsets = [0, 0, 0], sizes = [1, 1, 32], strides = [1, 1, 1]} : vector<1x8x32xf32> to vector<1x1x32xf32>
      %276 = vector.shape_cast %275 : vector<1x1x32xf32> to vector<1x32xf32>
      %c0_189 = arith.constant 0 : index
      %c0_190 = arith.constant 0 : index
      %277 = vector.load %arg23[%c0_189, %c0_190] : memref<32x32xbf16, #tpu.memory_space<vmem>>, vector<32x32xbf16>
      %278 = arith.truncf %276 : vector<1x32xf32> to vector<1x32xbf16>
      %cst_191 = arith.constant dense<0.000000e+00> : vector<1x32xf32>
      %279 = tpu.matmul %278, %277, %cst_191 {dimension_numbers = #tpu.dot_dimension_numbers<[1], [0], [0], [1], [0, 0, 1, 1], [], []>} : vector<1x32xbf16>, vector<32x32xbf16>, vector<1x32xf32> -> vector<1x32xf32>
      %c0_192 = arith.constant 0 : index
      %c0_193 = arith.constant 0 : index
      %280 = vector.load %arg24[%c0_192, %c0_193] : memref<1x32xf32, #tpu.memory_space<vmem>>, vector<1x32xf32>
      %281 = arith.addf %279, %280 : vector<1x32xf32>
      %cst_194 = arith.constant 0.000000e+00 : f32
      %282 = vector.broadcast %cst_194 : f32 to vector<1x32xf32>
      %283 = arith.maximumf %281, %282 : vector<1x32xf32>
      %c0_195 = arith.constant 0 : index
      %c0_196 = arith.constant 0 : index
      %284 = vector.load %arg25[%c0_195, %c0_196] : memref<32x128xbf16, #tpu.memory_space<vmem>>, vector<32x128xbf16>
      %285 = arith.truncf %283 : vector<1x32xf32> to vector<1x32xbf16>
      %cst_197 = arith.constant dense<0.000000e+00> : vector<1x128xf32>
      %286 = tpu.matmul %285, %284, %cst_197 {dimension_numbers = #tpu.dot_dimension_numbers<[1], [0], [0], [1], [0, 0, 1, 1], [], []>} : vector<1x32xbf16>, vector<32x128xbf16>, vector<1x128xf32> -> vector<1x128xf32>
      %c0_198 = arith.constant 0 : index
      %c0_199 = arith.constant 0 : index
      %287 = vector.load %arg26[%c0_198, %c0_199] : memref<1x128xf32, #tpu.memory_space<vmem>>, vector<1x128xf32>
      %288 = arith.addf %286, %287 : vector<1x128xf32>
      %289 = vector.shape_cast %288 : vector<1x128xf32> to vector<1x1x128xf32>
      %c0_200 = arith.constant 0 : index
      %c0_201 = arith.constant 0 : index
      %c0_202 = arith.constant 0 : index
      %290 = vector.load %arg27[%c0_200, %c0_201, %c0_202] : memref<1x1x128xf32, #tpu.memory_space<vmem>>, vector<1x1x128xf32>
      tpu.vector_store %arg27[%c0_200, %c0_201, %c0_202], %289 {strides = array<i32>} : memref<1x1x128xf32, #tpu.memory_space<vmem>>, vector<1x1x128xf32>,
    } else {
    }
    return
  }
  func.func @transform_0(%arg0: i32, %arg1: i32) -> (i32, i32, i32) {
    %c0_i32 = arith.constant 0 : i32
    %c0_i32_0 = arith.constant 0 : i32
    %c0_i32_1 = arith.constant 0 : i32
    return %arg0, %c0_i32, %c0_i32_0 : i32, i32, i32
  }
  func.func @transform_1(%arg0: i32, %arg1: i32) -> (i32, i32, i32) {
    %c0_i32 = arith.constant 0 : i32
    %c0_i32_0 = arith.constant 0 : i32
    %c0_i32_1 = arith.constant 0 : i32
    %c0_i32_2 = arith.constant 0 : i32
    return %c0_i32, %c0_i32_0, %c0_i32_1 : i32, i32, i32
  }
  func.func @transform_2(%arg0: i32, %arg1: i32) -> (i32, i32, i32) {
    %c0_i32 = arith.constant 0 : i32
    %c0_i32_0 = arith.constant 0 : i32
    %c0_i32_1 = arith.constant 0 : i32
    return %arg0, %c0_i32, %c0_i32_0 : i32, i32, i32
  }
  func.func @transform_3(%arg0: i32, %arg1: i32) -> (i32, i32) {
    %c0_i32 = arith.constant 0 : i32
    %c0_i32_0 = arith.constant 0 : i32
    %c0_i32_1 = arith.constant 0 : i32
    return %c0_i32, %c0_i32_0 : i32, i32
  }
  func.func @transform_4(%arg0: i32, %arg1: i32) -> (i32, i32) {
    %c0_i32 = arith.constant 0 : i32
    %c0_i32_0 = arith.constant 0 : i32
    %c0_i32_1 = arith.constant 0 : i32
    return %c0_i32, %c0_i32_0 : i32, i32
  }
  func.func @transform_5(%arg0: i32, %arg1: i32) -> (i32, i32, i32, i32) {
    %c0_i32 = arith.constant 0 : i32
    %c0_i32_0 = arith.constant 0 : i32
    %c0_i32_1 = arith.constant 0 : i32
    %c0_i32_2 = arith.constant 0 : i32
    return %arg1, %c0_i32, %c0_i32_0, %c0_i32_1 : i32, i32, i32, i32
  }
  func.func @transform_6(%arg0: i32, %arg1: i32) -> (i32, i32, i32, i32) {
    %c0_i32 = arith.constant 0 : i32
    %c0_i32_0 = arith.constant 0 : i32
    %c0_i32_1 = arith.constant 0 : i32
    %c0_i32_2 = arith.constant 0 : i32
    return %arg1, %c0_i32, %c0_i32_0, %c0_i32_1 : i32, i32, i32, i32
  }
  func.func @transform_7(%arg0: i32, %arg1: i32) -> (i32, i32, i32, i32) {
    %c0_i32 = arith.constant 0 : i32
    %c0_i32_0 = arith.constant 0 : i32
    %c0_i32_1 = arith.constant 0 : i32
    %c0_i32_2 = arith.constant 0 : i32
    return %arg1, %c0_i32, %c0_i32_0, %c0_i32_1 : i32, i32, i32, i32
  }
  func.func @transform_8(%arg0: i32, %arg1: i32) -> (i32, i32, i32, i32) {
    %c0_i32 = arith.constant 0 : i32
    %c0_i32_0 = arith.constant 0 : i32
    %c0_i32_1 = arith.constant 0 : i32
    %c0_i32_2 = arith.constant 0 : i32
    return %arg1, %c0_i32, %c0_i32_0, %c0_i32_1 : i32, i32, i32, i32
  }
  func.func @transform_9(%arg0: i32, %arg1: i32) -> (i32, i32, i32, i32) {
    %c0_i32 = arith.constant 0 : i32
    %c0_i32_0 = arith.constant 0 : i32
    %c0_i32_1 = arith.constant 0 : i32
    %c0_i32_2 = arith.constant 0 : i32
    return %arg1, %c0_i32, %c0_i32_0, %c0_i32_1 : i32, i32, i32, i32
  }
  func.func @transform_10(%arg0: i32, %arg1: i32) -> (i32, i32, i32, i32) {
    %c0_i32 = arith.constant 0 : i32
    %c0_i32_0 = arith.constant 0 : i32
    %c0_i32_1 = arith.constant 0 : i32
    %c0_i32_2 = arith.constant 0 : i32
    return %arg1, %c0_i32, %c0_i32_0, %c0_i32_1 : i32, i32, i32, i32
  }
  func.func @transform_11(%arg0: i32, %arg1: i32) -> (i32, i32, i32, i32) {
    %c0_i32 = arith.constant 0 : i32
    %c0_i32_0 = arith.constant 0 : i32
    %c0_i32_1 = arith.constant 0 : i32
    %c0_i32_2 = arith.constant 0 : i32
    return %arg1, %c0_i32, %c0_i32_0, %c0_i32_1 : i32, i32, i32, i32
  }
  func.func @transform_12(%arg0: i32, %arg1: i32) -> (i32, i32, i32) {
    %c0_i32 = arith.constant 0 : i32
    %c0_i32_0 = arith.constant 0 : i32
    %c0_i32_1 = arith.constant 0 : i32
    return %arg1, %c0_i32, %c0_i32_0 : i32, i32, i32
  }
  func.func @transform_13(%arg0: i32, %arg1: i32) -> (i32, i32, i32) {
    %c0_i32 = arith.constant 0 : i32
    %c0_i32_0 = arith.constant 0 : i32
    %c0_i32_1 = arith.constant 0 : i32
    return %arg1, %c0_i32, %c0_i32_0 : i32, i32, i32
  }
  func.func @transform_14(%arg0: i32, %arg1: i32) -> (i32, i32, i32) {
    %c0_i32 = arith.constant 0 : i32
    %c0_i32_0 = arith.constant 0 : i32
    %c0_i32_1 = arith.constant 0 : i32
    return %arg1, %c0_i32, %c0_i32_0 : i32, i32, i32
  }
  func.func @transform_15(%arg0: i32, %arg1: i32) -> (i32, i32, i32) {
    %c0_i32 = arith.constant 0 : i32
    %c0_i32_0 = arith.constant 0 : i32
    %c0_i32_1 = arith.constant 0 : i32
    return %arg1, %c0_i32, %c0_i32_0 : i32, i32, i32
  }
  func.func @transform_16(%arg0: i32, %arg1: i32) -> (i32, i32, i32) {
    %c0_i32 = arith.constant 0 : i32
    %c0_i32_0 = arith.constant 0 : i32
    %c0_i32_1 = arith.constant 0 : i32
    return %arg1, %c0_i32, %c0_i32_0 : i32, i32, i32
  }
  func.func @transform_17(%arg0: i32, %arg1: i32) -> (i32, i32, i32) {
    %c0_i32 = arith.constant 0 : i32
    %c0_i32_0 = arith.constant 0 : i32
    %c0_i32_1 = arith.constant 0 : i32
    return %arg1, %c0_i32, %c0_i32_0 : i32, i32, i32
  }
  func.func @transform_18(%arg0: i32, %arg1: i32) -> (i32, i32, i32) {
    %c0_i32 = arith.constant 0 : i32
    %c0_i32_0 = arith.constant 0 : i32
    %c0_i32_1 = arith.constant 0 : i32
    return %arg1, %c0_i32, %c0_i32_0 : i32, i32, i32
  }
  func.func @transform_19(%arg0: i32, %arg1: i32) -> (i32, i32, i32) {
    %c0_i32 = arith.constant 0 : i32
    %c0_i32_0 = arith.constant 0 : i32
    %c0_i32_1 = arith.constant 0 : i32
    return %arg1, %c0_i32, %c0_i32_0 : i32, i32, i32
  }
  func.func @transform_20(%arg0: i32, %arg1: i32) -> (i32, i32, i32) {
    %c0_i32 = arith.constant 0 : i32
    %c0_i32_0 = arith.constant 0 : i32
    %c0_i32_1 = arith.constant 0 : i32
    return %arg1, %c0_i32, %c0_i32_0 : i32, i32, i32
  }
  func.func @transform_21(%arg0: i32, %arg1: i32) -> (i32, i32) {
    %c0_i32 = arith.constant 0 : i32
    %c0_i32_0 = arith.constant 0 : i32
    %c0_i32_1 = arith.constant 0 : i32
    return %c0_i32, %c0_i32_0 : i32, i32
  }
  func.func @transform_22(%arg0: i32, %arg1: i32) -> (i32, i32) {
    %c0_i32 = arith.constant 0 : i32
    %c0_i32_0 = arith.constant 0 : i32
    %c0_i32_1 = arith.constant 0 : i32
    return %c0_i32, %c0_i32_0 : i32, i32
  }
  func.func @transform_23(%arg0: i32, %arg1: i32) -> (i32, i32) {
    %c0_i32 = arith.constant 0 : i32
    %c0_i32_0 = arith.constant 0 : i32
    %c0_i32_1 = arith.constant 0 : i32
    return %c0_i32, %c0_i32_0 : i32, i32
  }
  func.func @transform_24(%arg0: i32, %arg1: i32) -> (i32, i32) {
    %c0_i32 = arith.constant 0 : i32
    %c0_i32_0 = arith.constant 0 : i32
    %c0_i32_1 = arith.constant 0 : i32
    return %c0_i32, %c0_i32_0 : i32, i32
  }
  func.func @transform_25(%arg0: i32, %arg1: i32) -> (i32, i32, i32) {
    %c0_i32 = arith.constant 0 : i32
    %c0_i32_0 = arith.constant 0 : i32
    %c0_i32_1 = arith.constant 0 : i32
    return %arg0, %c0_i32, %c0_i32_0 : i32, i32, i32
  }
}

</mosaic_0001>

<llo_original>
// kernel: sparse_model_forward.1
$region0: #{sparse_model_forward.1}
  #allocation0 [shape = 'u32[]', space=smem, size = 0x4, offset = 0x4, fixed_abs, tag = 'smem constant byte address 0x4 - core index']
  #allocation1 [shape = 'u32[72,128]{1,0:T(1,128)}', space=vmem, size = 0x9000, scoped, tag = 'internal scratch']
  #allocation2 [shape = 'f32[8,32]{1,0:T(8,128)}', space=vmem, size = 0x1000, scoped, tag = 'scratch operand']
  %s0 = inlined_call_operand.vmem [shape: f32[2,8,32], index: 0, kind: input, shape index: {}]
  %s1 = inlined_call_operand.vmem [shape: f32[1,8,32], index: 1, kind: input, shape index: {}]
  %s2 = inlined_call_operand.vmem [shape: f32[2,1,8], index: 2, kind: input, shape index: {}]
  %s3 = inlined_call_operand.vmem [shape: f32[1,32], index: 3, kind: input, shape index: {}]
  %s4 = inlined_call_operand.vmem [shape: f32[1,32], index: 4, kind: input, shape index: {}]
  %s5 = inlined_call_operand.vmem [shape: bf16[2,4,32,8], index: 5, kind: input, shape index: {}]
  %s6 = inlined_call_operand.vmem [shape: f32[2,4,1,8], index: 6, kind: input, shape index: {}]
  %s7 = inlined_call_operand.vmem [shape: bf16[2,4,32,8], index: 7, kind: input, shape index: {}]
  %s8 = inlined_call_operand.vmem [shape: f32[2,4,1,8], index: 8, kind: input, shape index: {}]
  %s9 = inlined_call_operand.vmem [shape: bf16[2,4,32,8], index: 9, kind: input, shape index: {}]
  %s10 = inlined_call_operand.vmem [shape: f32[2,4,1,8], index: 10, kind: input, shape index: {}]
  %s11 = inlined_call_operand.vmem [shape: bf16[2,4,8,32], index: 11, kind: input, shape index: {}]
  %s12 = inlined_call_operand.vmem [shape: f32[2,1,32], index: 12, kind: input, shape index: {}]
  %s13 = inlined_call_operand.vmem [shape: f32[2,1,32], index: 13, kind: input, shape index: {}]
  %s14 = inlined_call_operand.vmem [shape: f32[2,1,32], index: 14, kind: input, shape index: {}]
  %s15 = inlined_call_operand.vmem [shape: bf16[2,32,64], index: 15, kind: input, shape index: {}]
  %s16 = inlined_call_operand.vmem [shape: f32[2,1,64], index: 16, kind: input, shape index: {}]
  %s17 = inlined_call_operand.vmem [shape: bf16[2,64,32], index: 17, kind: input, shape index: {}]
  %s18 = inlined_call_operand.vmem [shape: f32[2,1,32], index: 18, kind: input, shape index: {}]
  %s19 = inlined_call_operand.vmem [shape: f32[2,1,32], index: 19, kind: input, shape index: {}]
  %s20 = inlined_call_operand.vmem [shape: f32[2,1,32], index: 20, kind: input, shape index: {}]
  %s21 = inlined_call_operand.vmem [shape: bf16[32,32], index: 21, kind: input, shape index: {}]
  %s22 = inlined_call_operand.vmem [shape: f32[1,32], index: 22, kind: input, shape index: {}]
  %s23 = inlined_call_operand.vmem [shape: bf16[32,128], index: 23, kind: input, shape index: {}]
  %s24 = inlined_call_operand.vmem [shape: f32[1,128], index: 24, kind: input, shape index: {}]
  %s25 = inlined_call_operand.hbm [shape: f32[2,1,128], index: 25, kind: output, shape index: {}]
  %s26 = sld [smem:[#allocation0]]
  $region141: #{sparse_model_forward.1} parent=0
    _
  %s28 = ssub.s32 1, %s26
  %s29 = scalar_select 0, %s28, %s26
  $region1: #{sparse_model_forward.1} parent=0
    #allocation3 [shape = 'u8[1024]{0}', space=vmem, size = 0x400, scoped, tag = 'output window, operand 0']
    #allocation4 [shape = 's32[2]{0}', space=sflag, size = 0x8, scoped, tag = 'scoped memory for sparse_model_forward.1']
    %30 = vsyncpa [#allocation4], 0
    %s31 = scalar_lea.sflag [#allocation4], 1
    %32 = vsyncpa %s31, 0
    loop: start=0, step=1, limit=6
    $region2: #{sparse_model_forward.1} parent=1 // loop_pre_header
      _
    $region3: #{sparse_model_forward.1} parent=1 // loop_header
      %s34 = sphi 0, %s38
      %p35 = scmp.ge.s32.totalorder %s34, 6
      %s41 = sphi 0, %s53
      %s42 = sphi 0, %s49
      %s43 = sphi 0, %s41
      %s44 = sphi 0, %s42
      %s45 = sphi 0, %s43
      %s46 = sphi 0, %s44
      %s56 = sphi 0, %s58
      %s59 = sphi 0, %s56
      %s60 = sphi 0, %s59
      %s76 = sphi 0, %s60
      %s80 = sphi 0, %s80
      %s82 = sphi 0, %s80
      %s83 = sphi 0, %s82
      %s97 = sphi 0, %s83
      %s103 = sphi 0, %s105
      %s106 = sphi 0, %s103
      %s107 = sphi 0, %s106
      %s123 = sphi 0, %s107
      %s127 = sphi 0, %s127
      %s129 = sphi 0, %s127
      %s130 = sphi 0, %s129
      %s144 = sphi 0, %s130
      %s148 = sphi 0, %s148
      %s150 = sphi 0, %s148
      %s151 = sphi 0, %s150
      %s165 = sphi 0, %s151
      %s171 = sphi 0, %s173
      %s174 = sphi 0, %s171
      %s175 = sphi 0, %s174
      %s191 = sphi 0, %s175
      %s197 = sphi 0, %s199
      %s200 = sphi 0, %s197
      %s201 = sphi 0, %s200
      %s217 = sphi 0, %s201
      %s223 = sphi 0, %s225
      %s226 = sphi 0, %s223
      %s227 = sphi 0, %s226
      %s243 = sphi 0, %s227
      %s249 = sphi 0, %s251
      %s252 = sphi 0, %s249
      %s253 = sphi 0, %s252
      %s269 = sphi 0, %s253
      %s275 = sphi 0, %s277
      %s278 = sphi 0, %s275
      %s279 = sphi 0, %s278
      %s295 = sphi 0, %s279
      %s301 = sphi 0, %s303
      %s304 = sphi 0, %s301
      %s305 = sphi 0, %s304
      %s321 = sphi 0, %s305
      %s327 = sphi 0, %s329
      %s330 = sphi 0, %s327
      %s331 = sphi 0, %s330
      %s347 = sphi 0, %s331
      %s353 = sphi 0, %s355
      %s356 = sphi 0, %s353
      %s357 = sphi 0, %s356
      %s373 = sphi 0, %s357
      %s379 = sphi 0, %s381
      %s382 = sphi 0, %s379
      %s383 = sphi 0, %s382
      %s399 = sphi 0, %s383
      %s405 = sphi 0, %s407
      %s408 = sphi 0, %s405
      %s409 = sphi 0, %s408
      %s425 = sphi 0, %s409
      %s431 = sphi 0, %s433
      %s434 = sphi 0, %s431
      %s435 = sphi 0, %s434
      %s451 = sphi 0, %s435
      %s457 = sphi 0, %s459
      %s460 = sphi 0, %s457
      %s461 = sphi 0, %s460
      %s477 = sphi 0, %s461
      %s483 = sphi 0, %s485
      %s486 = sphi 0, %s483
      %s487 = sphi 0, %s486
      %s503 = sphi 0, %s487
      %s509 = sphi 0, %s511
      %s512 = sphi 0, %s509
      %s513 = sphi 0, %s512
      %s529 = sphi 0, %s513
      %s535 = sphi 0, %s537
      %s538 = sphi 0, %s535
      %s539 = sphi 0, %s538
      %s555 = sphi 0, %s539
      %s561 = sphi 0, %s563
      %s564 = sphi 0, %s561
      %s565 = sphi 0, %s564
      %s581 = sphi 0, %s565
      %s585 = sphi 0, %s585
      %s587 = sphi 0, %s585
      %s588 = sphi 0, %s587
      %s602 = sphi 0, %s588
      %s606 = sphi 0, %s606
      %s608 = sphi 0, %s606
      %s609 = sphi 0, %s608
      %s623 = sphi 0, %s609
      %s627 = sphi 0, %s627
      %s629 = sphi 0, %s627
      %s630 = sphi 0, %s629
      %s644 = sphi 0, %s630
      %s648 = sphi 0, %s648
      %s650 = sphi 0, %s648
      %s651 = sphi 0, %s650
      %s665 = sphi 0, %s651
      %s671 = sphi 0, %s673
      %s674 = sphi 0, %s671
      %s675 = sphi 0, %s674
      %s691 = sphi 0, %s675
    $region4: #{sparse_model_forward.1} parent=1 // loop_header_branch
      %37 = sbr.rel (%p35) target = $region8
    $region5: #{sparse_model_forward.1} parent=1 // loop_body
      %s39 = ssub.s32 %s34, 1
      %s40 = ssub.s32 %s34, 2
      %s47 = sadd.s32 1, %s42
      %p48 = scmp.ge.s32.totalorder %s47, 2
      %s49 = scalar_select %p48, 0, %s47
      %s50 = sadd.s32 1, %s41
      %s51 = scalar_select %p48, %s50, %s41
      %p52 = scmp.ge.s32.totalorder %s51, 2
      %s53 = scalar_select %p52, 0, %s51
      %s54 = ssub.s32 %s41, %s53
      %p55 = scmp.eq.s32.totalorder %s54, 0
      %s57 = sadd.s32 %s56, 1
      %s58 = scalar_select %p55, %s56, %s57
      %p61 = pneg %p55
      %p62 = scmp.eq.s32.totalorder %s34, 3
      %p63 = por %p61, %p62
      %p64 = scmp.ne.s32.totalorder %s56, %s59
      %p65 = scmp.eq.s32.totalorder %s34, 0
      %p66 = por %p64, %p65
      %p67 = scmp.ne.s32.totalorder %s56, %s59
      %p68 = scmp.eq.s32.totalorder %s39, 3
      %p69 = por %p67, %p68
      %p70 = scmp.ne.s32.totalorder %s59, %s60
      %p71 = scmp.eq.s32.totalorder %s39, 0
      %p72 = por %p70, %p71
      %p73 = scmp.ne.s32.totalorder %s59, %s60
      %p74 = scmp.eq.s32.totalorder %s40, 3
      %p75 = por %p73, %p74
      %p77 = scmp.ne.s32.totalorder %s60, %s76
      %p78 = scmp.eq.s32.totalorder %s40, 0
      %p79 = por %p77, %p78
      %s81 = sadd.s32 %s80, 1
      %p84 = scmp.eq.s32.totalorder %s34, 3
      %p85 = scmp.ne.s32.totalorder %s80, %s82
      %p86 = scmp.eq.s32.totalorder %s34, 0
      %p87 = por %p85, %p86
      %p88 = scmp.ne.s32.totalorder %s80, %s82
      %p89 = scmp.eq.s32.totalorder %s39, 3
      %p90 = por %p88, %p89
      %p91 = scmp.ne.s32.totalorder %s82, %s83
      %p92 = scmp.eq.s32.totalorder %s39, 0
      %p93 = por %p91, %p92
      %p94 = scmp.ne.s32.totalorder %s82, %s83
      %p95 = scmp.eq.s32.totalorder %s40, 3
      %p96 = por %p94, %p95
      %p98 = scmp.ne.s32.totalorder %s83, %s97
      %p99 = scmp.eq.s32.totalorder %s40, 0
      %p100 = por %p98, %p99
      %s101 = ssub.s32 %s41, %s53
      %p102 = scmp.eq.s32.totalorder %s101, 0
      %s104 = sadd.s32 %s103, 1
      %s105 = scalar_select %p102, %s103, %s104
      %p108 = pneg %p102
      %p109 = scmp.eq.s32.totalorder %s34, 3
      %p110 = por %p108, %p109
      %p111 = scmp.ne.s32.totalorder %s103, %s106
      %p112 = scmp.eq.s32.totalorder %s34, 0
      %p113 = por %p111, %p112
      %p114 = scmp.ne.s32.totalorder %s103, %s106
      %p115 = scmp.eq.s32.totalorder %s39, 3
      %p116 = por %p114, %p115
      %p117 = scmp.ne.s32.totalorder %s106, %s107
      %p118 = scmp.eq.s32.totalorder %s39, 0
      %p119 = por %p117, %p118
      %p120 = scmp.ne.s32.totalorder %s106, %s107
      %p121 = scmp.eq.s32.totalorder %s40, 3
      %p122 = por %p120, %p121
      %p124 = scmp.ne.s32.totalorder %s107, %s123
      %p125 = scmp.eq.s32.totalorder %s40, 0
      %p126 = por %p124, %p125
      %s128 = sadd.s32 %s127, 1
      %p131 = scmp.eq.s32.totalorder %s34, 3
      %p132 = scmp.ne.s32.totalorder %s127, %s129
      %p133 = scmp.eq.s32.totalorder %s34, 0
      %p134 = por %p132, %p133
      %p135 = scmp.ne.s32.totalorder %s127, %s129
      %p136 = scmp.eq.s32.totalorder %s39, 3
      %p137 = por %p135, %p136
      %p138 = scmp.ne.s32.totalorder %s129, %s130
      %p139 = scmp.eq.s32.totalorder %s39, 0
      %p140 = por %p138, %p139
      %p141 = scmp.ne.s32.totalorder %s129, %s130
      %p142 = scmp.eq.s32.totalorder %s40, 3
      %p143 = por %p141, %p142
      %p145 = scmp.ne.s32.totalorder %s130, %s144
      %p146 = scmp.eq.s32.totalorder %s40, 0
      %p147 = por %p145, %p146
      %s149 = sadd.s32 %s148, 1
      %p152 = scmp.eq.s32.totalorder %s34, 3
      %p153 = scmp.ne.s32.totalorder %s148, %s150
      %p154 = scmp.eq.s32.totalorder %s34, 0
      %p155 = por %p153, %p154
      %p156 = scmp.ne.s32.totalorder %s148, %s150
      %p157 = scmp.eq.s32.totalorder %s39, 3
      %p158 = por %p156, %p157
      %p159 = scmp.ne.s32.totalorder %s150, %s151
      %p160 = scmp.eq.s32.totalorder %s39, 0
      %p161 = por %p159, %p160
      %p162 = scmp.ne.s32.totalorder %s150, %s151
      %p163 = scmp.eq.s32.totalorder %s40, 3
      %p164 = por %p162, %p163
      %p166 = scmp.ne.s32.totalorder %s151, %s165
      %p167 = scmp.eq.s32.totalorder %s40, 0
      %p168 = por %p166, %p167
      %s169 = ssub.s32 %s42, %s49
      %p170 = scmp.eq.s32.totalorder %s169, 0
      %s172 = sadd.s32 %s171, 1
      %s173 = scalar_select %p170, %s171, %s172
      %p176 = pneg %p170
      %p177 = scmp.eq.s32.totalorder %s34, 3
      %p178 = por %p176, %p177
      %p179 = scmp.ne.s32.totalorder %s171, %s174
      %p180 = scmp.eq.s32.totalorder %s34, 0
      %p181 = por %p179, %p180
      %p182 = scmp.ne.s32.totalorder %s171, %s174
      %p183 = scmp.eq.s32.totalorder %s39, 3
      %p184 = por %p182, %p183
      %p185 = scmp.ne.s32.totalorder %s174, %s175
      %p186 = scmp.eq.s32.totalorder %s39, 0
      %p187 = por %p185, %p186
      %p188 = scmp.ne.s32.totalorder %s174, %s175
      %p189 = scmp.eq.s32.totalorder %s40, 3
      %p190 = por %p188, %p189
      %p192 = scmp.ne.s32.totalorder %s175, %s191
      %p193 = scmp.eq.s32.totalorder %s40, 0
      %p194 = por %p192, %p193
      %s195 = ssub.s32 %s42, %s49
      %p196 = scmp.eq.s32.totalorder %s195, 0
      %s198 = sadd.s32 %s197, 1
      %s199 = scalar_select %p196, %s197, %s198
      %p202 = pneg %p196
      %p203 = scmp.eq.s32.totalorder %s34, 3
      %p204 = por %p202, %p203
      %p205 = scmp.ne.s32.totalorder %s197, %s200
      %p206 = scmp.eq.s32.totalorder %s34, 0
      %p207 = por %p205, %p206
      %p208 = scmp.ne.s32.totalorder %s197, %s200
      %p209 = scmp.eq.s32.totalorder %s39, 3
      %p210 = por %p208, %p209
      %p211 = scmp.ne.s32.totalorder %s200, %s201
      %p212 = scmp.eq.s32.totalorder %s39, 0
      %p213 = por %p211, %p212
      %p214 = scmp.ne.s32.totalorder %s200, %s201
      %p215 = scmp.eq.s32.totalorder %s40, 3
      %p216 = por %p214, %p215
      %p218 = scmp.ne.s32.totalorder %s201, %s217
      %p219 = scmp.eq.s32.totalorder %s40, 0
      %p220 = por %p218, %p219
      %s221 = ssub.s32 %s42, %s49
      %p222 = scmp.eq.s32.totalorder %s221, 0
      %s224 = sadd.s32 %s223, 1
      %s225 = scalar_select %p222, %s223, %s224
      %p228 = pneg %p222
      %p229 = scmp.eq.s32.totalorder %s34, 3
      %p230 = por %p228, %p229
      %p231 = scmp.ne.s32.totalorder %s223, %s226
      %p232 = scmp.eq.s32.totalorder %s34, 0
      %p233 = por %p231, %p232
      %p234 = scmp.ne.s32.totalorder %s223, %s226
      %p235 = scmp.eq.s32.totalorder %s39, 3
      %p236 = por %p234, %p235
      %p237 = scmp.ne.s32.totalorder %s226, %s227
      %p238 = scmp.eq.s32.totalorder %s39, 0
      %p239 = por %p237, %p238
      %p240 = scmp.ne.s32.totalorder %s226, %s227
      %p241 = scmp.eq.s32.totalorder %s40, 3
      %p242 = por %p240, %p241
      %p244 = scmp.ne.s32.totalorder %s227, %s243
      %p245 = scmp.eq.s32.totalorder %s40, 0
      %p246 = por %p244, %p245
      %s247 = ssub.s32 %s42, %s49
      %p248 = scmp.eq.s32.totalorder %s247, 0
      %s250 = sadd.s32 %s249, 1
      %s251 = scalar_select %p248, %s249, %s250
      %p254 = pneg %p248
      %p255 = scmp.eq.s32.totalorder %s34, 3
      %p256 = por %p254, %p255
      %p257 = scmp.ne.s32.totalorder %s249, %s252
      %p258 = scmp.eq.s32.totalorder %s34, 0
      %p259 = por %p257, %p258
      %p260 = scmp.ne.s32.totalorder %s249, %s252
      %p261 = scmp.eq.s32.totalorder %s39, 3
      %p262 = por %p260, %p261
      %p263 = scmp.ne.s32.totalorder %s252, %s253
      %p264 = scmp.eq.s32.totalorder %s39, 0
      %p265 = por %p263, %p264
      %p266 = scmp.ne.s32.totalorder %s252, %s253
      %p267 = scmp.eq.s32.totalorder %s40, 3
      %p268 = por %p266, %p267
      %p270 = scmp.ne.s32.totalorder %s253, %s269
      %p271 = scmp.eq.s32.totalorder %s40, 0
      %p272 = por %p270, %p271
      %s273 = ssub.s32 %s42, %s49
      %p274 = scmp.eq.s32.totalorder %s273, 0
      %s276 = sadd.s32 %s275, 1
      %s277 = scalar_select %p274, %s275, %s276
      %p280 = pneg %p274
      %p281 = scmp.eq.s32.totalorder %s34, 3
      %p282 = por %p280, %p281
      %p283 = scmp.ne.s32.totalorder %s275, %s278
      %p284 = scmp.eq.s32.totalorder %s34, 0
      %p285 = por %p283, %p284
      %p286 = scmp.ne.s32.totalorder %s275, %s278
      %p287 = scmp.eq.s32.totalorder %s39, 3
      %p288 = por %p286, %p287
      %p289 = scmp.ne.s32.totalorder %s278, %s279
      %p290 = scmp.eq.s32.totalorder %s39, 0
      %p291 = por %p289, %p290
      %p292 = scmp.ne.s32.totalorder %s278, %s279
      %p293 = scmp.eq.s32.totalorder %s40, 3
      %p294 = por %p292, %p293
      %p296 = scmp.ne.s32.totalorder %s279, %s295
      %p297 = scmp.eq.s32.totalorder %s40, 0
      %p298 = por %p296, %p297
      %s299 = ssub.s32 %s42, %s49
      %p300 = scmp.eq.s32.totalorder %s299, 0
      %s302 = sadd.s32 %s301, 1
      %s303 = scalar_select %p300, %s301, %s302
      %p306 = pneg %p300
      %p307 = scmp.eq.s32.totalorder %s34, 3
      %p308 = por %p306, %p307
      %p309 = scmp.ne.s32.totalorder %s301, %s304
      %p310 = scmp.eq.s32.totalorder %s34, 0
      %p311 = por %p309, %p310
      %p312 = scmp.ne.s32.totalorder %s301, %s304
      %p313 = scmp.eq.s32.totalorder %s39, 3
      %p314 = por %p312, %p313
      %p315 = scmp.ne.s32.totalorder %s304, %s305
      %p316 = scmp.eq.s32.totalorder %s39, 0
      %p317 = por %p315, %p316
      %p318 = scmp.ne.s32.totalorder %s304, %s305
      %p319 = scmp.eq.s32.totalorder %s40, 3
      %p320 = por %p318, %p319
      %p322 = scmp.ne.s32.totalorder %s305, %s321
      %p323 = scmp.eq.s32.totalorder %s40, 0
      %p324 = por %p322, %p323
      %s325 = ssub.s32 %s42, %s49
      %p326 = scmp.eq.s32.totalorder %s325, 0
      %s328 = sadd.s32 %s327, 1
      %s329 = scalar_select %p326, %s327, %s328
      %p332 = pneg %p326
      %p333 = scmp.eq.s32.totalorder %s34, 3
      %p334 = por %p332, %p333
      %p335 = scmp.ne.s32.totalorder %s327, %s330
      %p336 = scmp.eq.s32.totalorder %s34, 0
      %p337 = por %p335, %p336
      %p338 = scmp.ne.s32.totalorder %s327, %s330
      %p339 = scmp.eq.s32.totalorder %s39, 3
      %p340 = por %p338, %p339
      %p341 = scmp.ne.s32.totalorder %s330, %s331
      %p342 = scmp.eq.s32.totalorder %s39, 0
      %p343 = por %p341, %p342
      %p344 = scmp.ne.s32.totalorder %s330, %s331
      %p345 = scmp.eq.s32.totalorder %s40, 3
      %p346 = por %p344, %p345
      %p348 = scmp.ne.s32.totalorder %s331, %s347
      %p349 = scmp.eq.s32.totalorder %s40, 0
      %p350 = por %p348, %p349
      %s351 = ssub.s32 %s42, %s49
      %p352 = scmp.eq.s32.totalorder %s351, 0
      %s354 = sadd.s32 %s353, 1
      %s355 = scalar_select %p352, %s353, %s354
      %p358 = pneg %p352
      %p359 = scmp.eq.s32.totalorder %s34, 3
      %p360 = por %p358, %p359
      %p361 = scmp.ne.s32.totalorder %s353, %s356
      %p362 = scmp.eq.s32.totalorder %s34, 0
      %p363 = por %p361, %p362
      %p364 = scmp.ne.s32.totalorder %s353, %s356
      %p365 = scmp.eq.s32.totalorder %s39, 3
      %p366 = por %p364, %p365
      %p367 = scmp.ne.s32.totalorder %s356, %s357
      %p368 = scmp.eq.s32.totalorder %s39, 0
      %p369 = por %p367, %p368
      %p370 = scmp.ne.s32.totalorder %s356, %s357
      %p371 = scmp.eq.s32.totalorder %s40, 3
      %p372 = por %p370, %p371
      %p374 = scmp.ne.s32.totalorder %s357, %s373
      %p375 = scmp.eq.s32.totalorder %s40, 0
      %p376 = por %p374, %p375
      %s377 = ssub.s32 %s42, %s49
      %p378 = scmp.eq.s32.totalorder %s377, 0
      %s380 = sadd.s32 %s379, 1
      %s381 = scalar_select %p378, %s379, %s380
      %p384 = pneg %p378
      %p385 = scmp.eq.s32.totalorder %s34, 3
      %p386 = por %p384, %p385
      %p387 = scmp.ne.s32.totalorder %s379, %s382
      %p388 = scmp.eq.s32.totalorder %s34, 0
      %p389 = por %p387, %p388
      %p390 = scmp.ne.s32.totalorder %s379, %s382
      %p391 = scmp.eq.s32.totalorder %s39, 3
      %p392 = por %p390, %p391
      %p393 = scmp.ne.s32.totalorder %s382, %s383
      %p394 = scmp.eq.s32.totalorder %s39, 0
      %p395 = por %p393, %p394
      %p396 = scmp.ne.s32.totalorder %s382, %s383
      %p397 = scmp.eq.s32.totalorder %s40, 3
      %p398 = por %p396, %p397
      %p400 = scmp.ne.s32.totalorder %s383, %s399
      %p401 = scmp.eq.s32.totalorder %s40, 0
      %p402 = por %p400, %p401
      %s403 = ssub.s32 %s42, %s49
      %p404 = scmp.eq.s32.totalorder %s403, 0
      %s406 = sadd.s32 %s405, 1
      %s407 = scalar_select %p404, %s405, %s406
      %p410 = pneg %p404
      %p411 = scmp.eq.s32.totalorder %s34, 3
      %p412 = por %p410, %p411
      %p413 = scmp.ne.s32.totalorder %s405, %s408
      %p414 = scmp.eq.s32.totalorder %s34, 0
      %p415 = por %p413, %p414
      %p416 = scmp.ne.s32.totalorder %s405, %s408
      %p417 = scmp.eq.s32.totalorder %s39, 3
      %p418 = por %p416, %p417
      %p419 = scmp.ne.s32.totalorder %s408, %s409
      %p420 = scmp.eq.s32.totalorder %s39, 0
      %p421 = por %p419, %p420
      %p422 = scmp.ne.s32.totalorder %s408, %s409
      %p423 = scmp.eq.s32.totalorder %s40, 3
      %p424 = por %p422, %p423
      %p426 = scmp.ne.s32.totalorder %s409, %s425
      %p427 = scmp.eq.s32.totalorder %s40, 0
      %p428 = por %p426, %p427
      %s429 = ssub.s32 %s42, %s49
      %p430 = scmp.eq.s32.totalorder %s429, 0
      %s432 = sadd.s32 %s431, 1
      %s433 = scalar_select %p430, %s431, %s432
      %p436 = pneg %p430
      %p437 = scmp.eq.s32.totalorder %s34, 3
      %p438 = por %p436, %p437
      %p439 = scmp.ne.s32.totalorder %s431, %s434
      %p440 = scmp.eq.s32.totalorder %s34, 0
      %p441 = por %p439, %p440
      %p442 = scmp.ne.s32.totalorder %s431, %s434
      %p443 = scmp.eq.s32.totalorder %s39, 3
      %p444 = por %p442, %p443
      %p445 = scmp.ne.s32.totalorder %s434, %s435
      %p446 = scmp.eq.s32.totalorder %s39, 0
      %p447 = por %p445, %p446
      %p448 = scmp.ne.s32.totalorder %s434, %s435
      %p449 = scmp.eq.s32.totalorder %s40, 3
      %p450 = por %p448, %p449
      %p452 = scmp.ne.s32.totalorder %s435, %s451
      %p453 = scmp.eq.s32.totalorder %s40, 0
      %p454 = por %p452, %p453
      %s455 = ssub.s32 %s42, %s49
      %p456 = scmp.eq.s32.totalorder %s455, 0
      %s458 = sadd.s32 %s457, 1
      %s459 = scalar_select %p456, %s457, %s458
      %p462 = pneg %p456
      %p463 = scmp.eq.s32.totalorder %s34, 3
      %p464 = por %p462, %p463
      %p465 = scmp.ne.s32.totalorder %s457, %s460
      %p466 = scmp.eq.s32.totalorder %s34, 0
      %p467 = por %p465, %p466
      %p468 = scmp.ne.s32.totalorder %s457, %s460
      %p469 = scmp.eq.s32.totalorder %s39, 3
      %p470 = por %p468, %p469
      %p471 = scmp.ne.s32.totalorder %s460, %s461
      %p472 = scmp.eq.s32.totalorder %s39, 0
      %p473 = por %p471, %p472
      %p474 = scmp.ne.s32.totalorder %s460, %s461
      %p475 = scmp.eq.s32.totalorder %s40, 3
      %p476 = por %p474, %p475
      %p478 = scmp.ne.s32.totalorder %s461, %s477
      %p479 = scmp.eq.s32.totalorder %s40, 0
      %p480 = por %p478, %p479
      %s481 = ssub.s32 %s42, %s49
      %p482 = scmp.eq.s32.totalorder %s481, 0
      %s484 = sadd.s32 %s483, 1
      %s485 = scalar_select %p482, %s483, %s484
      %p488 = pneg %p482
      %p489 = scmp.eq.s32.totalorder %s34, 3
      %p490 = por %p488, %p489
      %p491 = scmp.ne.s32.totalorder %s483, %s486
      %p492 = scmp.eq.s32.totalorder %s34, 0
      %p493 = por %p491, %p492
      %p494 = scmp.ne.s32.totalorder %s483, %s486
      %p495 = scmp.eq.s32.totalorder %s39, 3
      %p496 = por %p494, %p495
      %p497 = scmp.ne.s32.totalorder %s486, %s487
      %p498 = scmp.eq.s32.totalorder %s39, 0
      %p499 = por %p497, %p498
      %p500 = scmp.ne.s32.totalorder %s486, %s487
      %p501 = scmp.eq.s32.totalorder %s40, 3
      %p502 = por %p500, %p501
      %p504 = scmp.ne.s32.totalorder %s487, %s503
      %p505 = scmp.eq.s32.totalorder %s40, 0
      %p506 = por %p504, %p505
      %s507 = ssub.s32 %s42, %s49
      %p508 = scmp.eq.s32.totalorder %s507, 0
      %s510 = sadd.s32 %s509, 1
      %s511 = scalar_select %p508, %s509, %s510
      %p514 = pneg %p508
      %p515 = scmp.eq.s32.totalorder %s34, 3
      %p516 = por %p514, %p515
      %p517 = scmp.ne.s32.totalorder %s509, %s512
      %p518 = scmp.eq.s32.totalorder %s34, 0
      %p519 = por %p517, %p518
      %p520 = scmp.ne.s32.totalorder %s509, %s512
      %p521 = scmp.eq.s32.totalorder %s39, 3
      %p522 = por %p520, %p521
      %p523 = scmp.ne.s32.totalorder %s512, %s513
      %p524 = scmp.eq.s32.totalorder %s39, 0
      %p525 = por %p523, %p524
      %p526 = scmp.ne.s32.totalorder %s512, %s513
      %p527 = scmp.eq.s32.totalorder %s40, 3
      %p528 = por %p526, %p527
      %p530 = scmp.ne.s32.totalorder %s513, %s529
      %p531 = scmp.eq.s32.totalorder %s40, 0
      %p532 = por %p530, %p531
      %s533 = ssub.s32 %s42, %s49
      %p534 = scmp.eq.s32.totalorder %s533, 0
      %s536 = sadd.s32 %s535, 1
      %s537 = scalar_select %p534, %s535, %s536
      %p540 = pneg %p534
      %p541 = scmp.eq.s32.totalorder %s34, 3
      %p542 = por %p540, %p541
      %p543 = scmp.ne.s32.totalorder %s535, %s538
      %p544 = scmp.eq.s32.totalorder %s34, 0
      %p545 = por %p543, %p544
      %p546 = scmp.ne.s32.totalorder %s535, %s538
      %p547 = scmp.eq.s32.totalorder %s39, 3
      %p548 = por %p546, %p547
      %p549 = scmp.ne.s32.totalorder %s538, %s539
      %p550 = scmp.eq.s32.totalorder %s39, 0
      %p551 = por %p549, %p550
      %p552 = scmp.ne.s32.totalorder %s538, %s539
      %p553 = scmp.eq.s32.totalorder %s40, 3
      %p554 = por %p552, %p553
      %p556 = scmp.ne.s32.totalorder %s539, %s555
      %p557 = scmp.eq.s32.totalorder %s40, 0
      %p558 = por %p556, %p557
      %s559 = ssub.s32 %s42, %s49
      %p560 = scmp.eq.s32.totalorder %s559, 0
      %s562 = sadd.s32 %s561, 1
      %s563 = scalar_select %p560, %s561, %s562
      %p566 = pneg %p560
      %p567 = scmp.eq.s32.totalorder %s34, 3
      %p568 = por %p566, %p567
      %p569 = scmp.ne.s32.totalorder %s561, %s564
      %p570 = scmp.eq.s32.totalorder %s34, 0
      %p571 = por %p569, %p570
      %p572 = scmp.ne.s32.totalorder %s561, %s564
      %p573 = scmp.eq.s32.totalorder %s39, 3
      %p574 = por %p572, %p573
      %p575 = scmp.ne.s32.totalorder %s564, %s565
      %p576 = scmp.eq.s32.totalorder %s39, 0
      %p577 = por %p575, %p576
      %p578 = scmp.ne.s32.totalorder %s564, %s565
      %p579 = scmp.eq.s32.totalorder %s40, 3
      %p580 = por %p578, %p579
      %p582 = scmp.ne.s32.totalorder %s565, %s581
      %p583 = scmp.eq.s32.totalorder %s40, 0
      %p584 = por %p582, %p583
      %s586 = sadd.s32 %s585, 1
      %p589 = scmp.eq.s32.totalorder %s34, 3
      %p590 = scmp.ne.s32.totalorder %s585, %s587
      %p591 = scmp.eq.s32.totalorder %s34, 0
      %p592 = por %p590, %p591
      %p593 = scmp.ne.s32.totalorder %s585, %s587
      %p594 = scmp.eq.s32.totalorder %s39, 3
      %p595 = por %p593, %p594
      %p596 = scmp.ne.s32.totalorder %s587, %s588
      %p597 = scmp.eq.s32.totalorder %s39, 0
      %p598 = por %p596, %p597
      %p599 = scmp.ne.s32.totalorder %s587, %s588
      %p600 = scmp.eq.s32.totalorder %s40, 3
      %p601 = por %p599, %p600
      %p603 = scmp.ne.s32.totalorder %s588, %s602
      %p604 = scmp.eq.s32.totalorder %s40, 0
      %p605 = por %p603, %p604
      %s607 = sadd.s32 %s606, 1
      %p610 = scmp.eq.s32.totalorder %s34, 3
      %p611 = scmp.ne.s32.totalorder %s606, %s608
      %p612 = scmp.eq.s32.totalorder %s34, 0
      %p613 = por %p611, %p612
      %p614 = scmp.ne.s32.totalorder %s606, %s608
      %p615 = scmp.eq.s32.totalorder %s39, 3
      %p616 = por %p614, %p615
      %p617 = scmp.ne.s32.totalorder %s608, %s609
      %p618 = scmp.eq.s32.totalorder %s39, 0
      %p619 = por %p617, %p618
      %p620 = scmp.ne.s32.totalorder %s608, %s609
      %p621 = scmp.eq.s32.totalorder %s40, 3
      %p622 = por %p620, %p621
      %p624 = scmp.ne.s32.totalorder %s609, %s623
      %p625 = scmp.eq.s32.totalorder %s40, 0
      %p626 = por %p624, %p625
      %s628 = sadd.s32 %s627, 1
      %p631 = scmp.eq.s32.totalorder %s34, 3
      %p632 = scmp.ne.s32.totalorder %s627, %s629
      %p633 = scmp.eq.s32.totalorder %s34, 0
      %p634 = por %p632, %p633
      %p635 = scmp.ne.s32.totalorder %s627, %s629
      %p636 = scmp.eq.s32.totalorder %s39, 3
      %p637 = por %p635, %p636
      %p638 = scmp.ne.s32.totalorder %s629, %s630
      %p639 = scmp.eq.s32.totalorder %s39, 0
      %p640 = por %p638, %p639
      %p641 = scmp.ne.s32.totalorder %s629, %s630
      %p642 = scmp.eq.s32.totalorder %s40, 3
      %p643 = por %p641, %p642
      %p645 = scmp.ne.s32.totalorder %s630, %s644
      %p646 = scmp.eq.s32.totalorder %s40, 0
      %p647 = por %p645, %p646
      %s649 = sadd.s32 %s648, 1
      %p652 = scmp.eq.s32.totalorder %s34, 3
      %p653 = scmp.ne.s32.totalorder %s648, %s650
      %p654 = scmp.eq.s32.totalorder %s34, 0
      %p655 = por %p653, %p654
      %p656 = scmp.ne.s32.totalorder %s648, %s650
      %p657 = scmp.eq.s32.totalorder %s39, 3
      %p658 = por %p656, %p657
      %p659 = scmp.ne.s32.totalorder %s650, %s651
      %p660 = scmp.eq.s32.totalorder %s39, 0
      %p661 = por %p659, %p660
      %p662 = scmp.ne.s32.totalorder %s650, %s651
      %p663 = scmp.eq.s32.totalorder %s40, 3
      %p664 = por %p662, %p663
      %p666 = scmp.ne.s32.totalorder %s651, %s665
      %p667 = scmp.eq.s32.totalorder %s40, 0
      %p668 = por %p666, %p667
      %s669 = ssub.s32 %s41, %s53
      %p670 = scmp.eq.s32.totalorder %s669, 0
      %s672 = sadd.s32 %s671, 1
      %s673 = scalar_select %p670, %s671, %s672
      %p676 = pneg %p670
      %p677 = scmp.eq.s32.totalorder %s34, 3
      %p678 = por %p676, %p677
      %p679 = scmp.ne.s32.totalorder %s671, %s674
      %p680 = scmp.eq.s32.totalorder %s34, 0
      %p681 = por %p679, %p680
      %p682 = scmp.ne.s32.totalorder %s671, %s674
      %p683 = scmp.eq.s32.totalorder %s39, 3
      %p684 = por %p682, %p683
      %p685 = scmp.ne.s32.totalorder %s674, %s675
      %p686 = scmp.eq.s32.totalorder %s39, 0
      %p687 = por %p685, %p686
      %p688 = scmp.ne.s32.totalorder %s674, %s675
      %p689 = scmp.eq.s32.totalorder %s40, 3
      %p690 = por %p688, %p689
      %p692 = scmp.ne.s32.totalorder %s675, %s691
      %p693 = scmp.eq.s32.totalorder %s40, 0
      %p694 = por %p692, %p693
      %p695 = scmp.le.s32.totalorder 1, %s34
      %p696 = scmp.lt.s32.totalorder %s34, 5
      %p697 = pnand %p695, %p696
      %p698 = pneg %p697
      // Predicated region
      $region9: #{sparse_model_forward.1} parent=5 // pred_check
        _
      $region10: #{sparse_model_forward.1} parent=5 // pred_check_branch
        %700 = sbr.rel (%p697) target = $region12
      $region11: #{sparse_model_forward.1} parent=5 // pred_region
        %s701 = ssub.s32 %s34, 1
        // Predicated region
        $region13: #{sparse_model_forward.1} parent=11 // pred_check
          %p702 = pneg %p93
        $region14: #{sparse_model_forward.1} parent=11 // pred_check_branch
          %704 = sbr.rel (%p702) target = $region16
        $region15: #{sparse_model_forward.1} parent=11 // pred_region
          _
        $region16: #{sparse_model_forward.1} parent=11 // pred_fallthru
          _
        // Predicated region
        $region17: #{sparse_model_forward.1} parent=11 // pred_check
          %p705 = pneg %p140
        $region18: #{sparse_model_forward.1} parent=11 // pred_check_branch
          %707 = sbr.rel (%p705) target = $region20
        $region19: #{sparse_model_forward.1} parent=11 // pred_region
          _
        $region20: #{sparse_model_forward.1} parent=11 // pred_fallthru
          _
        // Predicated region
        $region21: #{sparse_model_forward.1} parent=11 // pred_check
          %p708 = pneg %p161
        $region22: #{sparse_model_forward.1} parent=11 // pred_check_branch
          %710 = sbr.rel (%p708) target = $region24
        $region23: #{sparse_model_forward.1} parent=11 // pred_region
          _
        $region24: #{sparse_model_forward.1} parent=11 // pred_fallthru
          _
        // Predicated region
        $region25: #{sparse_model_forward.1} parent=11 // pred_check
          %p711 = pneg %p598
        $region26: #{sparse_model_forward.1} parent=11 // pred_check_branch
          %713 = sbr.rel (%p711) target = $region28
        $region27: #{sparse_model_forward.1} parent=11 // pred_region
          _
        $region28: #{sparse_model_forward.1} parent=11 // pred_fallthru
          _
        // Predicated region
        $region29: #{sparse_model_forward.1} parent=11 // pred_check
          %p714 = pneg %p619
        $region30: #{sparse_model_forward.1} parent=11 // pred_check_branch
          %716 = sbr.rel (%p714) target = $region32
        $region31: #{sparse_model_forward.1} parent=11 // pred_region
          _
        $region32: #{sparse_model_forward.1} parent=11 // pred_fallthru
          _
        // Predicated region
        $region33: #{sparse_model_forward.1} parent=11 // pred_check
          %p717 = pneg %p640
        $region34: #{sparse_model_forward.1} parent=11 // pred_check_branch
          %719 = sbr.rel (%p717) target = $region36
        $region35: #{sparse_model_forward.1} parent=11 // pred_region
          _
        $region36: #{sparse_model_forward.1} parent=11 // pred_fallthru
          _
        // Predicated region
        $region37: #{sparse_model_forward.1} parent=11 // pred_check
          %p720 = pneg %p661
        $region38: #{sparse_model_forward.1} parent=11 // pred_check_branch
          %722 = sbr.rel (%p720) target = $region40
        $region39: #{sparse_model_forward.1} parent=11 // pred_region
          _
        $region40: #{sparse_model_forward.1} parent=11 // pred_fallthru
          _
      $region12: #{sparse_model_forward.1} parent=5 // pred_fallthru
        _
      %p723 = scmp.lt.s32.totalorder %s34, 4
      // Predicated region
      $region41: #{sparse_model_forward.1} parent=5 // pred_check
        %p724 = pneg %p723
      $region42: #{sparse_model_forward.1} parent=5 // pred_check_branch
        %726 = sbr.rel (%p724) target = $region44
      $region43: #{sparse_model_forward.1} parent=5 // pred_region
        // Predicated region
        $region45: #{sparse_model_forward.1} parent=43 // pred_check
          %p727 = pneg %p66
        $region46: #{sparse_model_forward.1} parent=43 // pred_check_branch
          %729 = sbr.rel (%p727) target = $region48
        $region47: #{sparse_model_forward.1} parent=43 // pred_region
          %p730 = scmp.lt.s32.totalorder %s41, 1
          %s731 = scalar_select %p730, %s41, 1
          %s732 = smul.addr %s731, 8
          %s733 = scalar_lea.vmem %s0, %s732
        $region48: #{sparse_model_forward.1} parent=43 // pred_fallthru
          _
        // Predicated region
        $region49: #{sparse_model_forward.1} parent=43 // pred_check
          %p734 = pneg %p113
        $region50: #{sparse_model_forward.1} parent=43 // pred_check_branch
          %736 = sbr.rel (%p734) target = $region52
        $region51: #{sparse_model_forward.1} parent=43 // pred_region
          %p737 = scmp.lt.s32.totalorder %s41, 1
          %s738 = scalar_select %p737, %s41, 1
          %s739 = scalar_lea.vmem %s2, %s738
        $region52: #{sparse_model_forward.1} parent=43 // pred_fallthru
          _
        // Predicated region
        $region53: #{sparse_model_forward.1} parent=43 // pred_check
          %p740 = pneg %p181
        $region54: #{sparse_model_forward.1} parent=43 // pred_check_branch
          %742 = sbr.rel (%p740) target = $region56
        $region55: #{sparse_model_forward.1} parent=43 // pred_region
          %p743 = scmp.lt.s32.totalorder %s42, 1
          %s744 = scalar_select %p743, %s42, 1
          %s745 = smul.addr %s744, 16
          %s746 = smul.addr %s745, 4
          %s747 = scalar_lea.vmem %s5, %s746
        $region56: #{sparse_model_forward.1} parent=43 // pred_fallthru
          _
        // Predicated region
        $region57: #{sparse_model_forward.1} parent=43 // pred_check
          %p748 = pneg %p207
        $region58: #{sparse_model_forward.1} parent=43 // pred_check_branch
          %750 = sbr.rel (%p748) target = $region60
        $region59: #{sparse_model_forward.1} parent=43 // pred_region
          %p751 = scmp.lt.s32.totalorder %s42, 1
          %s752 = scalar_select %p751, %s42, 1
          %s753 = smul.addr %s752, 4
          %s754 = scalar_lea.vmem %s6, %s753
        $region60: #{sparse_model_forward.1} parent=43 // pred_fallthru
          _
        // Predicated region
        $region61: #{sparse_model_forward.1} parent=43 // pred_check
          %p755 = pneg %p233
        $region62: #{sparse_model_forward.1} parent=43 // pred_check_branch
          %757 = sbr.rel (%p755) target = $region64
        $region63: #{sparse_model_forward.1} parent=43 // pred_region
          %p758 = scmp.lt.s32.totalorder %s42, 1
          %s759 = scalar_select %p758, %s42, 1
          %s760 = smul.addr %s759, 16
          %s761 = smul.addr %s760, 4
          %s762 = scalar_lea.vmem %s7, %s761
        $region64: #{sparse_model_forward.1} parent=43 // pred_fallthru
          _
        // Predicated region
        $region65: #{sparse_model_forward.1} parent=43 // pred_check
          %p763 = pneg %p259
        $region66: #{sparse_model_forward.1} parent=43 // pred_check_branch
          %765 = sbr.rel (%p763) target = $region68
        $region67: #{sparse_model_forward.1} parent=43 // pred_region
          %p766 = scmp.lt.s32.totalorder %s42, 1
          %s767 = scalar_select %p766, %s42, 1
          %s768 = smul.addr %s767, 4
          %s769 = scalar_lea.vmem %s8, %s768
        $region68: #{sparse_model_forward.1} parent=43 // pred_fallthru
          _
        // Predicated region
        $region69: #{sparse_model_forward.1} parent=43 // pred_check
          %p770 = pneg %p285
        $region70: #{sparse_model_forward.1} parent=43 // pred_check_branch
          %772 = sbr.rel (%p770) target = $region72
        $region71: #{sparse_model_forward.1} parent=43 // pred_region
          %p773 = scmp.lt.s32.totalorder %s42, 1
          %s774 = scalar_select %p773, %s42, 1
          %s775 = smul.addr %s774, 16
          %s776 = smul.addr %s775, 4
          %s777 = scalar_lea.vmem %s9, %s776
        $region72: #{sparse_model_forward.1} parent=43 // pred_fallthru
          _
        // Predicated region
        $region73: #{sparse_model_forward.1} parent=43 // pred_check
          %p778 = pneg %p311
        $region74: #{sparse_model_forward.1} parent=43 // pred_check_branch
          %780 = sbr.rel (%p778) target = $region76
        $region75: #{sparse_model_forward.1} parent=43 // pred_region
          %p781 = scmp.lt.s32.totalorder %s42, 1
          %s782 = scalar_select %p781, %s42, 1
          %s783 = smul.addr %s782, 4
          %s784 = scalar_lea.vmem %s10, %s783
        $region76: #{sparse_model_forward.1} parent=43 // pred_fallthru
          _
        // Predicated region
        $region77: #{sparse_model_forward.1} parent=43 // pred_check
          %p785 = pneg %p337
        $region78: #{sparse_model_forward.1} parent=43 // pred_check_branch
          %787 = sbr.rel (%p785) target = $region80
        $region79: #{sparse_model_forward.1} parent=43 // pred_region
          %p788 = scmp.lt.s32.totalorder %s42, 1
          %s789 = scalar_select %p788, %s42, 1
          %s790 = smul.addr %s789, 4
          %s791 = smul.addr %s790, 4
          %s792 = scalar_lea.vmem %s11, %s791
        $region80: #{sparse_model_forward.1} parent=43 // pred_fallthru
          _
        // Predicated region
        $region81: #{sparse_model_forward.1} parent=43 // pred_check
          %p793 = pneg %p363
        $region82: #{sparse_model_forward.1} parent=43 // pred_check_branch
          %795 = sbr.rel (%p793) target = $region84
        $region83: #{sparse_model_forward.1} parent=43 // pred_region
          %p796 = scmp.lt.s32.totalorder %s42, 1
          %s797 = scalar_select %p796, %s42, 1
          %s798 = scalar_lea.vmem %s12, %s797
        $region84: #{sparse_model_forward.1} parent=43 // pred_fallthru
          _
        // Predicated region
        $region85: #{sparse_model_forward.1} parent=43 // pred_check
          %p799 = pneg %p389
        $region86: #{sparse_model_forward.1} parent=43 // pred_check_branch
          %801 = sbr.rel (%p799) target = $region88
        $region87: #{sparse_model_forward.1} parent=43 // pred_region
          %p802 = scmp.lt.s32.totalorder %s42, 1
          %s803 = scalar_select %p802, %s42, 1
          %s804 = scalar_lea.vmem %s13, %s803
        $region88: #{sparse_model_forward.1} parent=43 // pred_fallthru
          _
        // Predicated region
        $region89: #{sparse_model_forward.1} parent=43 // pred_check
          %p805 = pneg %p415
        $region90: #{sparse_model_forward.1} parent=43 // pred_check_branch
          %807 = sbr.rel (%p805) target = $region92
        $region91: #{sparse_model_forward.1} parent=43 // pred_region
          %p808 = scmp.lt.s32.totalorder %s42, 1
          %s809 = scalar_select %p808, %s42, 1
          %s810 = scalar_lea.vmem %s14, %s809
        $region92: #{sparse_model_forward.1} parent=43 // pred_fallthru
          _
        // Predicated region
        $region93: #{sparse_model_forward.1} parent=43 // pred_check
          %p811 = pneg %p441
        $region94: #{sparse_model_forward.1} parent=43 // pred_check_branch
          %813 = sbr.rel (%p811) target = $region96
        $region95: #{sparse_model_forward.1} parent=43 // pred_region
          %p814 = scmp.lt.s32.totalorder %s42, 1
          %s815 = scalar_select %p814, %s42, 1
          %s816 = smul.addr %s815, 4
          %s817 = smul.addr %s816, 4
          %s818 = scalar_lea.vmem %s15, %s817
        $region96: #{sparse_model_forward.1} parent=43 // pred_fallthru
          _
        // Predicated region
        $region97: #{sparse_model_forward.1} parent=43 // pred_check
          %p819 = pneg %p467
        $region98: #{sparse_model_forward.1} parent=43 // pred_check_branch
          %821 = sbr.rel (%p819) target = $region100
        $region99: #{sparse_model_forward.1} parent=43 // pred_region
          %p822 = scmp.lt.s32.totalorder %s42, 1
          %s823 = scalar_select %p822, %s42, 1
          %s824 = scalar_lea.vmem %s16, %s823
        $region100: #{sparse_model_forward.1} parent=43 // pred_fallthru
          _
        // Predicated region
        $region101: #{sparse_model_forward.1} parent=43 // pred_check
          %p825 = pneg %p493
        $region102: #{sparse_model_forward.1} parent=43 // pred_check_branch
          %827 = sbr.rel (%p825) target = $region104
        $region103: #{sparse_model_forward.1} parent=43 // pred_region
          %p828 = scmp.lt.s32.totalorder %s42, 1
          %s829 = scalar_select %p828, %s42, 1
          %s830 = smul.addr %s829, 8
          %s831 = smul.addr %s830, 4
          %s832 = scalar_lea.vmem %s17, %s831
        $region104: #{sparse_model_forward.1} parent=43 // pred_fallthru
          _
        // Predicated region
        $region105: #{sparse_model_forward.1} parent=43 // pred_check
          %p833 = pneg %p519
        $region106: #{sparse_model_forward.1} parent=43 // pred_check_branch
          %835 = sbr.rel (%p833) target = $region108
        $region107: #{sparse_model_forward.1} parent=43 // pred_region
          %p836 = scmp.lt.s32.totalorder %s42, 1
          %s837 = scalar_select %p836, %s42, 1
          %s838 = scalar_lea.vmem %s18, %s837
        $region108: #{sparse_model_forward.1} parent=43 // pred_fallthru
          _
        // Predicated region
        $region109: #{sparse_model_forward.1} parent=43 // pred_check
          %p839 = pneg %p545
        $region110: #{sparse_model_forward.1} parent=43 // pred_check_branch
          %841 = sbr.rel (%p839) target = $region112
        $region111: #{sparse_model_forward.1} parent=43 // pred_region
          %p842 = scmp.lt.s32.totalorder %s42, 1
          %s843 = scalar_select %p842, %s42, 1
          %s844 = scalar_lea.vmem %s19, %s843
        $region112: #{sparse_model_forward.1} parent=43 // pred_fallthru
          _
        // Predicated region
        $region113: #{sparse_model_forward.1} parent=43 // pred_check
          %p845 = pneg %p571
        $region114: #{sparse_model_forward.1} parent=43 // pred_check_branch
          %847 = sbr.rel (%p845) target = $region116
        $region115: #{sparse_model_forward.1} parent=43 // pred_region
          %p848 = scmp.lt.s32.totalorder %s42, 1
          %s849 = scalar_select %p848, %s42, 1
          %s850 = scalar_lea.vmem %s20, %s849
        $region116: #{sparse_model_forward.1} parent=43 // pred_fallthru
          _
      $region44: #{sparse_model_forward.1} parent=5 // pred_fallthru
        _
      %p851 = scmp.le.s32.totalorder 1, %s34
      %p852 = scmp.lt.s32.totalorder %s34, 5
      %p853 = pnand %p851, %p852
      %p854 = pneg %p853
      // Predicated region
      $region117: #{sparse_model_forward.1} parent=5 // pred_check
        _
      $region118: #{sparse_model_forward.1} parent=5 // pred_check_branch
        %856 = sbr.rel (%p853) target = $region120
      $region119: #{sparse_model_forward.1} parent=5 // pred_region
        %s857 = ssub.s32 %s34, 1
        %p858 = scmp.lt.s32.totalorder %s43, 1
        %s859 = scalar_select %p858, %s43, 1
        %s860 = smul.addr %s859, 8
        %s861 = scalar_lea.vmem %s0, %s860
        %p862 = pneg %p72
        %p863 = pneg %p69
        %p864 = pneg %p93
        %p865 = pneg %p90
        %p866 = scmp.lt.s32.totalorder %s43, 1
        %s867 = scalar_select %p866, %s43, 1
        %s868 = scalar_lea.vmem %s2, %s867
        %p869 = pneg %p119
        %p870 = pneg %p116
        %p871 = pneg %p140
        %p872 = pneg %p137
        %p873 = pneg %p161
        %p874 = pneg %p158
        %p875 = scmp.lt.s32.totalorder %s44, 1
        %s876 = scalar_select %p875, %s44, 1
        %s877 = smul.addr %s876, 16
        %s878 = smul.addr %s877, 4
        %s879 = scalar_lea.vmem %s5, %s878
        %p880 = pneg %p187
        %p881 = pneg %p184
        %p882 = scmp.lt.s32.totalorder %s44, 1
        %s883 = scalar_select %p882, %s44, 1
        %s884 = smul.addr %s883, 4
        %s885 = scalar_lea.vmem %s6, %s884
        %p886 = pneg %p213
        %p887 = pneg %p210
        %p888 = scmp.lt.s32.totalorder %s44, 1
        %s889 = scalar_select %p888, %s44, 1
        %s890 = smul.addr %s889, 16
        %s891 = smul.addr %s890, 4
        %s892 = scalar_lea.vmem %s7, %s891
        %p893 = pneg %p239
        %p894 = pneg %p236
        %p895 = scmp.lt.s32.totalorder %s44, 1
        %s896 = scalar_select %p895, %s44, 1
        %s897 = smul.addr %s896, 4
        %s898 = scalar_lea.vmem %s8, %s897
        %p899 = pneg %p265
        %p900 = pneg %p262
        %p901 = scmp.lt.s32.totalorder %s44, 1
        %s902 = scalar_select %p901, %s44, 1
        %s903 = smul.addr %s902, 16
        %s904 = smul.addr %s903, 4
        %s905 = scalar_lea.vmem %s9, %s904
        %p906 = pneg %p291
        %p907 = pneg %p288
        %p908 = scmp.lt.s32.totalorder %s44, 1
        %s909 = scalar_select %p908, %s44, 1
        %s910 = smul.addr %s909, 4
        %s911 = scalar_lea.vmem %s10, %s910
        %p912 = pneg %p317
        %p913 = pneg %p314
        %p914 = scmp.lt.s32.totalorder %s44, 1
        %s915 = scalar_select %p914, %s44, 1
        %s916 = smul.addr %s915, 4
        %s917 = smul.addr %s916, 4
        %s918 = scalar_lea.vmem %s11, %s917
        %p919 = pneg %p343
        %p920 = pneg %p340
        %p921 = scmp.lt.s32.totalorder %s44, 1
        %s922 = scalar_select %p921, %s44, 1
        %s923 = scalar_lea.vmem %s12, %s922
        %p924 = pneg %p369
        %p925 = pneg %p366
        %p926 = scmp.lt.s32.totalorder %s44, 1
        %s927 = scalar_select %p926, %s44, 1
        %s928 = scalar_lea.vmem %s13, %s927
        %p929 = pneg %p395
        %p930 = pneg %p392
        %p931 = scmp.lt.s32.totalorder %s44, 1
        %s932 = scalar_select %p931, %s44, 1
        %s933 = scalar_lea.vmem %s14, %s932
        %p934 = pneg %p421
        %p935 = pneg %p418
        %p936 = scmp.lt.s32.totalorder %s44, 1
        %s937 = scalar_select %p936, %s44, 1
        %s938 = smul.addr %s937, 4
        %s939 = smul.addr %s938, 4
        %s940 = scalar_lea.vmem %s15, %s939
        %p941 = pneg %p447
        %p942 = pneg %p444
        %p943 = scmp.lt.s32.totalorder %s44, 1
        %s944 = scalar_select %p943, %s44, 1
        %s945 = scalar_lea.vmem %s16, %s944
        %p946 = pneg %p473
        %p947 = pneg %p470
        %p948 = scmp.lt.s32.totalorder %s44, 1
        %s949 = scalar_select %p948, %s44, 1
        %s950 = smul.addr %s949, 8
        %s951 = smul.addr %s950, 4
        %s952 = scalar_lea.vmem %s17, %s951
        %p953 = pneg %p499
        %p954 = pneg %p496
        %p955 = scmp.lt.s32.totalorder %s44, 1
        %s956 = scalar_select %p955, %s44, 1
        %s957 = scalar_lea.vmem %s18, %s956
        %p958 = pneg %p525
        %p959 = pneg %p522
        %p960 = scmp.lt.s32.totalorder %s44, 1
        %s961 = scalar_select %p960, %s44, 1
        %s962 = scalar_lea.vmem %s19, %s961
        %p963 = pneg %p551
        %p964 = pneg %p548
        %p965 = scmp.lt.s32.totalorder %s44, 1
        %s966 = scalar_select %p965, %s44, 1
        %s967 = scalar_lea.vmem %s20, %s966
        %p968 = pneg %p577
        %p969 = pneg %p574
        %p970 = pneg %p598
        %p971 = pneg %p595
        %p972 = pneg %p619
        %p973 = pneg %p616
        %p974 = pneg %p640
        %p975 = pneg %p637
        %p976 = pneg %p661
        %p977 = pneg %p658
        %p978 = pneg %p687
        %p979 = pneg %p684
        %s980 = sand.u32 %s674, 1
        %s981 = scalar_lea.sflag [#allocation4], %s980
        %s982 = sand.u32 %s674, 1
        %s983 = scalar_lea.vmem [#allocation3], %s982
        %p984 = scmp.lt.s32.totalorder %s43, 1
        %s985 = scalar_select %p984, %s43, 1
        %s986 = smul.addr %s985, 8
        %s987 = scalar_lea.vmem %s0, %s986
        %p988 = scmp.lt.s32.totalorder %s43, 1
        %s989 = scalar_select %p988, %s43, 1
        %s990 = scalar_lea.vmem %s2, %s989
        %p991 = scmp.lt.s32.totalorder %s44, 1
        %s992 = scalar_select %p991, %s44, 1
        %s993 = smul.addr %s992, 16
        %s994 = smul.addr %s993, 4
        %s995 = scalar_lea.vmem %s5, %s994
        %p996 = scmp.lt.s32.totalorder %s44, 1
        %s997 = scalar_select %p996, %s44, 1
        %s998 = smul.addr %s997, 4
        %s999 = scalar_lea.vmem %s6, %s998
        %p1000 = scmp.lt.s32.totalorder %s44, 1
        %s1001 = scalar_select %p1000, %s44, 1
        %s1002 = smul.addr %s1001, 16
        %s1003 = smul.addr %s1002, 4
        %s1004 = scalar_lea.vmem %s7, %s1003
        %p1005 = scmp.lt.s32.totalorder %s44, 1
        %s1006 = scalar_select %p1005, %s44, 1
        %s1007 = smul.addr %s1006, 4
        %s1008 = scalar_lea.vmem %s8, %s1007
        %p1009 = scmp.lt.s32.totalorder %s44, 1
        %s1010 = scalar_select %p1009, %s44, 1
        %s1011 = smul.addr %s1010, 16
        %s1012 = smul.addr %s1011, 4
        %s1013 = scalar_lea.vmem %s9, %s1012
        %p1014 = scmp.lt.s32.totalorder %s44, 1
        %s1015 = scalar_select %p1014, %s44, 1
        %s1016 = smul.addr %s1015, 4
        %s1017 = scalar_lea.vmem %s10, %s1016
        %p1018 = scmp.lt.s32.totalorder %s44, 1
        %s1019 = scalar_select %p1018, %s44, 1
        %s1020 = smul.addr %s1019, 4
        %s1021 = smul.addr %s1020, 4
        %s1022 = scalar_lea.vmem %s11, %s1021
        %p1023 = scmp.lt.s32.totalorder %s44, 1
        %s1024 = scalar_select %p1023, %s44, 1
        %s1025 = scalar_lea.vmem %s12, %s1024
        %p1026 = scmp.lt.s32.totalorder %s44, 1
        %s1027 = scalar_select %p1026, %s44, 1
        %s1028 = scalar_lea.vmem %s13, %s1027
        %p1029 = scmp.lt.s32.totalorder %s44, 1
        %s1030 = scalar_select %p1029, %s44, 1
        %s1031 = scalar_lea.vmem %s14, %s1030
        %p1032 = scmp.lt.s32.totalorder %s44, 1
        %s1033 = scalar_select %p1032, %s44, 1
        %s1034 = smul.addr %s1033, 4
        %s1035 = smul.addr %s1034, 4
        %s1036 = scalar_lea.vmem %s15, %s1035
        %p1037 = scmp.lt.s32.totalorder %s44, 1
        %s1038 = scalar_select %p1037, %s44, 1
        %s1039 = scalar_lea.vmem %s16, %s1038
        %p1040 = scmp.lt.s32.totalorder %s44, 1
        %s1041 = scalar_select %p1040, %s44, 1
        %s1042 = smul.addr %s1041, 8
        %s1043 = smul.addr %s1042, 4
        %s1044 = scalar_lea.vmem %s17, %s1043
        %p1045 = scmp.lt.s32.totalorder %s44, 1
        %s1046 = scalar_select %p1045, %s44, 1
        %s1047 = scalar_lea.vmem %s18, %s1046
        %p1048 = scmp.lt.s32.totalorder %s44, 1
        %s1049 = scalar_select %p1048, %s44, 1
        %s1050 = scalar_lea.vmem %s19, %s1049
        %p1051 = scmp.lt.s32.totalorder %s44, 1
        %s1052 = scalar_select %p1051, %s44, 1
        %s1053 = scalar_lea.vmem %s20, %s1052
        %p1055 = scmp.eq.s32.totalorder %s44, 0
        // Predicated region
        $region121: #{sparse_model_forward.1} parent=119 // pred_check
          %p1056 = pneg %p1055
        $region122: #{sparse_model_forward.1} parent=119 // pred_check_branch
          %1058 = sbr.rel (%p1056) target = $region124
        $region123: #{sparse_model_forward.1} parent=119 // pred_region
          %v1059 = vld [vmem:[%s987] sm:$0xff]
          %v1060 = vld [vmem:[%s1] sm:$0xff]
          %v1061 = vadd.f32 %v1059, %v1060
          %v1062 = vld [vmem:[%s3] sm:$0x1]
          %v1063 = vld [vmem:[%s4] sm:$0x1]
          %vm1064 = vcmask 261120
          %v1065 = vsel %vm1064, %v1061, 0.0
          %1066 = vadd.xlane.f32.xlu0 %v1065
          %v1067 = vpop.xlane.xlu0 %1066
          %v1068 = vrcp.pop 32.0
          %v1069 = vmul.f32 32.0, %v1068
          %v1070 = vsub.f32 1.0, %v1069
          %v1071 = vmul.f32 %v1068, %v1070
          %v1072 = vadd.f32 %v1068, %v1071
          %vm1073 = vweird.f32 %v1068
          %v1074 = vsel %vm1073, %v1068, %v1072
          %v1075 = vmul.f32 %v1067, %v1074
          %v1076 = vsub.f32 %v1061, %v1075
          %v1077 = vmul.f32 %v1076, %v1076
          %v1078 = vsel %vm1064, %v1077, 0.0
          %1079 = vadd.xlane.f32.xlu0 %v1078
          %v1080 = vpop.xlane.xlu0 %1079
          %v1081 = vmul.f32 %v1080, %v1074
          %v1082 = vadd.f32 %v1081, 1e-05
          %v1083 = vrsqrt.pop %v1082
          %v1084 = vmul.f32 %v1083, %v1082
          %v1085 = vmul.f32 %v1084, %v1083
          %v1086 = vmul.f32 0.5, %v1085
          %v1087 = vsub.f32 1.5, %v1086
          %v1088 = vmul.f32 %v1083, %v1087
          %vm1089 = vweird.f32 %v1082
          %vm1090 = vweird.f32 %v1083
          %vm1091 = vmor %vm1089, %vm1090
          %v1092 = vsel %vm1091, %v1083, %v1088
          %v1093 = vmul.f32 %v1076, %v1092
          %v1095 = vperm.slane %v1062, 0
          %v1097 = vmul.f32 %v1093, %v1095
          %v1099 = vperm.slane %v1063, 0
          %v1101 = vadd.f32 %v1097, %v1099
          %1102 = vst.msk [vmem:[#allocation2] sm:$0xff] %vm1064, %v1101
        $region124: #{sparse_model_forward.1} parent=119 // pred_fallthru
          _
        %v1103 = vld [vmem:[#allocation2] sm:$0xff]
        %v1104 = vld [vmem:[%s990] sm:$0x1]
        %v1105 = vld [vmem:[%s995] sm:$0xf]
        %v1106 = vld [vmem:[%s995 + $0x4] sm:$0xf]
        %v1107 = vld [vmem:[%s995 + $0x8] sm:$0xf]
        %v1108 = vld [vmem:[%s995 + $0xc] sm:$0xf]
        %v1109 = vpack.c.bf16 %v1103, %v1103
        %v1110 = vld [vmem:[%s999] sm:$0x1]
        %v1112 = vperm.slane %v1110, 0
        %v1118 = vunpack.c.l.b16 %v1105
        %v1119 = vunpack.c.l.b16 %v1106
        %v1120 = vunpack.c.l.b16 %v1107
        %v1121 = vunpack.c.l.b16 %v1108
        %v1122 = vpack.c.b16 %v1119, %v1118
        %v1123 = vpack.c.b16 %v1121, %v1120
        %vm1126 = vcmask 261120
        %v1128 = vsel %vm1126, %v1109, 0
        %1130 = vmatpush.bf16.msra.mxu0 0
        %1131 = vmatpush.bf16.msra.mxu0 0
        %1132 = vmatpush.bf16.msra.mxu0 0
        %1133 = vmatpush.bf16.msra.mxu0 0
        %1134 = vmatpush.bf16.msra.mxu0 0
        %1135 = vmatpush.bf16.msra.mxu0 0
        %1136 = vmatpush.bf16.msra.mxu0 %v1123
        %1137 = vmatpush.bf16.msra.mxu0 %v1122
        %1138 = vmatmul.bf16.gmra.mxu0 %v1128
        %v1139 = vpop.f32.mrf.mxu0
        %v1140 = vadd.f32 %v1112, %v1139
        %v1141 = vpop.f32.mrf.mxu0
        %1142 = vdwg.mxu0
        %v1143 = vld [vmem:[%s1004] sm:$0xf]
        %v1144 = vld [vmem:[%s1004 + $0x4] sm:$0xf]
        %v1145 = vld [vmem:[%s1004 + $0x8] sm:$0xf]
        %v1146 = vld [vmem:[%s1004 + $0xc] sm:$0xf]
        %v1147 = vld [vmem:[%s1008] sm:$0x1]
        %v1149 = vperm.slane %v1147, 0
        %v1155 = vunpack.c.l.b16 %v1143
        %v1156 = vunpack.c.l.b16 %v1144
        %v1157 = vunpack.c.l.b16 %v1145
        %v1158 = vunpack.c.l.b16 %v1146
        %v1159 = vpack.c.b16 %v1156, %v1155
        %v1160 = vpack.c.b16 %v1158, %v1157
        %1163 = vmatpush.bf16.msra.mxu0 0
        %1164 = vmatpush.bf16.msra.mxu0 0
        %1165 = vmatpush.bf16.msra.mxu0 0
        %1166 = vmatpush.bf16.msra.mxu0 0
        %1167 = vmatpush.bf16.msra.mxu0 0
        %1168 = vmatpush.bf16.msra.mxu0 0
        %1169 = vmatpush.bf16.msra.mxu0 %v1160
        %1170 = vmatpush.bf16.msra.mxu0 %v1159
        %1171 = vmatmul.bf16.gmra.mxu0 %v1128
        %v1172 = vpop.f32.mrf.mxu0
        %v1173 = vadd.f32 %v1149, %v1172
        %v1174 = vpop.f32.mrf.mxu0
        %1175 = vdwg.mxu0
        %v1176 = vld [vmem:[%s1013] sm:$0xf]
        %v1177 = vld [vmem:[%s1013 + $0x4] sm:$0xf]
        %v1178 = vld [vmem:[%s1013 + $0x8] sm:$0xf]
        %v1179 = vld [vmem:[%s1013 + $0xc] sm:$0xf]
        %v1180 = vld [vmem:[%s1017] sm:$0x1]
        %v1182 = vperm.slane %v1180, 0
        %v1188 = vunpack.c.l.b16 %v1176
        %v1189 = vunpack.c.l.b16 %v1177
        %v1190 = vunpack.c.l.b16 %v1178
        %v1191 = vunpack.c.l.b16 %v1179
        %v1192 = vpack.c.b16 %v1189, %v1188
        %v1193 = vpack.c.b16 %v1191, %v1190
        %1196 = vmatpush.bf16.msra.mxu0 0
        %1197 = vmatpush.bf16.msra.mxu0 0
        %1198 = vmatpush.bf16.msra.mxu0 0
        %1199 = vmatpush.bf16.msra.mxu0 0
        %1200 = vmatpush.bf16.msra.mxu0 0
        %1201 = vmatpush.bf16.msra.mxu0 0
        %1202 = vmatpush.bf16.msra.mxu0 %v1193
        %1203 = vmatpush.bf16.msra.mxu0 %v1192
        %1204 = vmatmul.bf16.gmra.mxu0 %v1128
        %v1205 = vpop.f32.mrf.mxu0
        %v1206 = vadd.f32 %v1182, %v1205
        %v1207 = vpop.f32.mrf.mxu0
        %1208 = vdwg.mxu0
        %v1210 = vperm.slane %v1104, 0
        %vm1212 = vcmask 64512
        %v1214 = vsel %vm1212, %v1140, 0
        %v1217 = vsel %vm1212, %v1173, 0
        %1219 = vmatpush.xpose.msra.mxu0 0.0
        %1220 = vmatpush.xpose.msra.mxu0 0.0
        %1221 = vmatpush.xpose.msra.mxu0 0.0
        %1222 = vmatpush.xpose.msra.mxu0 0.0
        %1223 = vmatpush.xpose.msra.mxu0 0.0
        %1224 = vmatpush.xpose.msra.mxu0 0.0
        %1225 = vmatpush.xpose.msra.mxu0 0.0
        %1226 = vmatpush.xpose.msra.mxu0 0.0
        %1227 = vmatpush.xpose.msra.mxu0 0.0
        %1228 = vmatpush.xpose.msra.mxu0 0.0
        %1229 = vmatpush.xpose.msra.mxu0 0.0
        %1230 = vmatpush.xpose.msra.mxu0 0.0
        %1231 = vmatpush.xpose.msra.mxu0 0.0
        %1232 = vmatpush.xpose.msra.mxu0 0.0
        %1233 = vmatpush.xpose.msra.mxu0 0.0
        %1234 = vmatpush.xpose.msra.mxu0 %v1217
        %1235 = vmatmul.f32.gmra.mxu0 %v1214
        %v1236 = vpop.f32.mrf.mxu0
        %v1237 = vadd.f32 %v1210, %v1236
        %1238 = vdwg.mxu0
        %v1239 = vsel %vm1212, %v1237, -inf
        %1240 = vmax.xlane.f32.xlu0 %v1239
        %v1241 = vpop.xlane.xlu0 %1240
        %v1242 = vsub.f32 %v1237, %v1241
        %v1243 = vmul.f32 %v1242, 1.442695
        %v1244 = vpow.pop %v1243
        %v1245 = vsel %vm1212, %v1244, 0.0
        %1246 = vadd.xlane.f32.xlu0 %v1245
        %v1247 = vpop.xlane.xlu0 %1246
        %v1248 = vrcp.pop %v1247
        %v1249 = vmul.f32 %v1244, %v1248
        %v1251 = vsel %vm1212, %v1249, 0
        %1253 = vmatpush.msra.mxu0 0.0
        %1254 = vmatpush.msra.mxu0 0.0
        %1255 = vmatpush.msra.mxu0 0.0
        %1256 = vmatpush.msra.mxu0 0.0
        %1257 = vmatpush.msra.mxu0 0.0
        %1258 = vmatpush.msra.mxu0 0.0
        %1259 = vmatpush.msra.mxu0 0.0
        %1260 = vmatpush.msra.mxu0 0.0
        %1261 = vmatpush.msra.mxu0 0.0
        %1262 = vmatpush.msra.mxu0 0.0
        %1263 = vmatpush.msra.mxu0 0.0
        %1264 = vmatpush.msra.mxu0 0.0
        %1265 = vmatpush.msra.mxu0 0.0
        %1266 = vmatpush.msra.mxu0 0.0
        %1267 = vmatpush.msra.mxu0 0.0
        %1268 = vmatpush.msra.mxu0 %v1206
        %1269 = vmatmul.f32.gmra.mxu0 %v1251
        %v1270 = vpop.f32.mrf.mxu0
        %v1271 = vadd.f32 0.0, %v1270
        %1272 = vdwg.mxu0
        %v1273 = vld [vmem:[%s1022] sm:$0xf]
        %v1274 = vpack.c.bf16 %v1271, %v1271
        %s1275 = scalar_lea.vmem %s995, 16
        %v1276 = vld [vmem:[%s1275] sm:$0xf]
        %v1277 = vld [vmem:[%s1275 + $0x4] sm:$0xf]
        %v1278 = vld [vmem:[%s1275 + $0x8] sm:$0xf]
        %v1279 = vld [vmem:[%s1275 + $0xc] sm:$0xf]
        %s1280 = scalar_lea.vmem %s999, 1
        %v1281 = vld [vmem:[%s1280] sm:$0x1]
        %v1283 = vperm.slane %v1281, 0
        %v1289 = vunpack.c.l.b16 %v1276
        %v1290 = vunpack.c.l.b16 %v1277
        %v1291 = vunpack.c.l.b16 %v1278
        %v1292 = vunpack.c.l.b16 %v1279
        %v1293 = vpack.c.b16 %v1290, %v1289
        %v1294 = vpack.c.b16 %v1292, %v1291
        %1297 = vmatpush.bf16.msra.mxu0 0
        %1298 = vmatpush.bf16.msra.mxu0 0
        %1299 = vmatpush.bf16.msra.mxu0 0
        %1300 = vmatpush.bf16.msra.mxu0 0
        %1301 = vmatpush.bf16.msra.mxu0 0
        %1302 = vmatpush.bf16.msra.mxu0 0
        %1303 = vmatpush.bf16.msra.mxu0 %v1294
        %1304 = vmatpush.bf16.msra.mxu0 %v1293
        %1305 = vmatmul.bf16.gmra.mxu0 %v1128
        %v1306 = vpop.f32.mrf.mxu0
        %v1307 = vadd.f32 %v1283, %v1306
        %v1308 = vpop.f32.mrf.mxu0
        %1309 = vdwg.mxu0
        %s1310 = scalar_lea.vmem %s1004, 16
        %v1311 = vld [vmem:[%s1310] sm:$0xf]
        %v1312 = vld [vmem:[%s1310 + $0x4] sm:$0xf]
        %v1313 = vld [vmem:[%s1310 + $0x8] sm:$0xf]
        %v1314 = vld [vmem:[%s1310 + $0xc] sm:$0xf]
        %s1315 = scalar_lea.vmem %s1008, 1
        %v1316 = vld [vmem:[%s1315] sm:$0x1]
        %v1318 = vperm.slane %v1316, 0
        %v1324 = vunpack.c.l.b16 %v1311
        %v1325 = vunpack.c.l.b16 %v1312
        %v1326 = vunpack.c.l.b16 %v1313
        %v1327 = vunpack.c.l.b16 %v1314
        %v1328 = vpack.c.b16 %v1325, %v1324
        %v1329 = vpack.c.b16 %v1327, %v1326
        %1332 = vmatpush.bf16.msra.mxu0 0
        %1333 = vmatpush.bf16.msra.mxu0 0
        %1334 = vmatpush.bf16.msra.mxu0 0
        %1335 = vmatpush.bf16.msra.mxu0 0
        %1336 = vmatpush.bf16.msra.mxu0 0
        %1337 = vmatpush.bf16.msra.mxu0 0
        %1338 = vmatpush.bf16.msra.mxu0 %v1329
        %1339 = vmatpush.bf16.msra.mxu0 %v1328
        %1340 = vmatmul.bf16.gmra.mxu0 %v1128
        %v1341 = vpop.f32.mrf.mxu0
        %v1342 = vadd.f32 %v1318, %v1341
        %v1343 = vpop.f32.mrf.mxu0
        %1344 = vdwg.mxu0
        %s1345 = scalar_lea.vmem %s1013, 16
        %v1346 = vld [vmem:[%s1345] sm:$0xf]
        %v1347 = vld [vmem:[%s1345 + $0x4] sm:$0xf]
        %v1348 = vld [vmem:[%s1345 + $0x8] sm:$0xf]
        %v1349 = vld [vmem:[%s1345 + $0xc] sm:$0xf]
        %s1350 = scalar_lea.vmem %s1017, 1
        %v1351 = vld [vmem:[%s1350] sm:$0x1]
        %v1353 = vperm.slane %v1351, 0
        %v1359 = vunpack.c.l.b16 %v1346
        %v1360 = vunpack.c.l.b16 %v1347
        %v1361 = vunpack.c.l.b16 %v1348
        %v1362 = vunpack.c.l.b16 %v1349
        %v1363 = vpack.c.b16 %v1360, %v1359
        %v1364 = vpack.c.b16 %v1362, %v1361
        %1367 = vmatpush.bf16.msra.mxu0 0
        %1368 = vmatpush.bf16.msra.mxu0 0
        %1369 = vmatpush.bf16.msra.mxu0 0
        %1370 = vmatpush.bf16.msra.mxu0 0
        %1371 = vmatpush.bf16.msra.mxu0 0
        %1372 = vmatpush.bf16.msra.mxu0 0
        %1373 = vmatpush.bf16.msra.mxu0 %v1364
        %1374 = vmatpush.bf16.msra.mxu0 %v1363
        %1375 = vmatmul.bf16.gmra.mxu0 %v1128
        %v1376 = vpop.f32.mrf.mxu0
        %v1377 = vadd.f32 %v1353, %v1376
        %v1378 = vpop.f32.mrf.mxu0
        %1379 = vdwg.mxu0
        %v1381 = vsel %vm1212, %v1307, 0
        %v1384 = vsel %vm1212, %v1342, 0
        %1386 = vmatpush.xpose.msra.mxu0 0.0
        %1387 = vmatpush.xpose.msra.mxu0 0.0
        %1388 = vmatpush.xpose.msra.mxu0 0.0
        %1389 = vmatpush.xpose.msra.mxu0 0.0
        %1390 = vmatpush.xpose.msra.mxu0 0.0
        %1391 = vmatpush.xpose.msra.mxu0 0.0
        %1392 = vmatpush.xpose.msra.mxu0 0.0
        %1393 = vmatpush.xpose.msra.mxu0 0.0
        %1394 = vmatpush.xpose.msra.mxu0 0.0
        %1395 = vmatpush.xpose.msra.mxu0 0.0
        %1396 = vmatpush.xpose.msra.mxu0 0.0
        %1397 = vmatpush.xpose.msra.mxu0 0.0
        %1398 = vmatpush.xpose.msra.mxu0 0.0
        %1399 = vmatpush.xpose.msra.mxu0 0.0
        %1400 = vmatpush.xpose.msra.mxu0 0.0
        %1401 = vmatpush.xpose.msra.mxu0 %v1384
        %1402 = vmatmul.f32.gmra.mxu0 %v1381
        %v1403 = vpop.f32.mrf.mxu0
        %v1404 = vadd.f32 %v1210, %v1403
        %1405 = vdwg.mxu0
        %v1406 = vsel %vm1212, %v1404, -inf
        %1407 = vmax.xlane.f32.xlu0 %v1406
        %v1408 = vpop.xlane.xlu0 %1407
        %v1409 = vsub.f32 %v1404, %v1408
        %v1410 = vmul.f32 %v1409, 1.442695
        %v1411 = vpow.pop %v1410
        %v1412 = vsel %vm1212, %v1411, 0.0
        %1413 = vadd.xlane.f32.xlu0 %v1412
        %v1414 = vpop.xlane.xlu0 %1413
        %v1415 = vrcp.pop %v1414
        %v1416 = vmul.f32 %v1411, %v1415
        %v1418 = vsel %vm1212, %v1416, 0
        %1420 = vmatpush.msra.mxu0 0.0
        %1421 = vmatpush.msra.mxu0 0.0
        %1422 = vmatpush.msra.mxu0 0.0
        %1423 = vmatpush.msra.mxu0 0.0
        %1424 = vmatpush.msra.mxu0 0.0
        %1425 = vmatpush.msra.mxu0 0.0
        %1426 = vmatpush.msra.mxu0 0.0
        %1427 = vmatpush.msra.mxu0 0.0
        %1428 = vmatpush.msra.mxu0 0.0
        %1429 = vmatpush.msra.mxu0 0.0
        %1430 = vmatpush.msra.mxu0 0.0
        %1431 = vmatpush.msra.mxu0 0.0
        %1432 = vmatpush.msra.mxu0 0.0
        %1433 = vmatpush.msra.mxu0 0.0
        %1434 = vmatpush.msra.mxu0 0.0
        %1435 = vmatpush.msra.mxu0 %v1377
        %1436 = vmatmul.f32.gmra.mxu0 %v1418
        %v1437 = vpop.f32.mrf.mxu0
        %v1438 = vadd.f32 0.0, %v1437
        %1439 = vdwg.mxu0
        %s1440 = scalar_lea.vmem %s1022, 4
        %v1441 = vld [vmem:[%s1440] sm:$0xf]
        %v1442 = vpack.c.bf16 %v1438, %v1438
        %v1444 = vsel %vm1212, %v1442, 0
        %vm1446 = vcmask 1043456
        %v1448 = vsel %vm1446, %v1441, 0
        %1450 = vmatpush.bf16.msra.mxu0 0
        %1451 = vmatpush.bf16.msra.mxu0 0
        %1452 = vmatpush.bf16.msra.mxu0 0
        %1453 = vmatpush.bf16.msra.mxu0 0
        %1454 = vmatpush.bf16.msra.mxu0 0
        %1455 = vmatpush.bf16.msra.mxu0 0
        %1456 = vmatpush.bf16.msra.mxu0 0
        %1457 = vmatpush.bf16.msra.mxu0 %v1448
        %1458 = vmatmul.bf16.gmra.mxu0 %v1444
        %v1459 = vpop.f32.mrf.mxu0
        %v1460 = vadd.f32 0.0, %v1459
        %v1461 = vpop.f32.mrf.mxu0
        %1462 = vdwg.mxu0
        %v1464 = vsel %vm1212, %v1274, 0
        %v1467 = vsel %vm1446, %v1273, 0
        %1469 = vmatpush.bf16.msra.mxu0 0
        %1470 = vmatpush.bf16.msra.mxu0 0
        %1471 = vmatpush.bf16.msra.mxu0 0
        %1472 = vmatpush.bf16.msra.mxu0 0
        %1473 = vmatpush.bf16.msra.mxu0 0
        %1474 = vmatpush.bf16.msra.mxu0 0
        %1475 = vmatpush.bf16.msra.mxu0 0
        %1476 = vmatpush.bf16.msra.mxu0 %v1467
        %1477 = vmatmul.bf16.gmra.mxu0 %v1464
        %v1478 = vpop.f32.mrf.mxu0
        %v1479 = vadd.f32 %v1460, %v1478
        %v1480 = vpop.f32.mrf.mxu0
        %1481 = vdwg.mxu0
        %s1482 = scalar_lea.vmem %s995, 32
        %v1483 = vld [vmem:[%s1482] sm:$0xf]
        %v1484 = vld [vmem:[%s1482 + $0x4] sm:$0xf]
        %v1485 = vld [vmem:[%s1482 + $0x8] sm:$0xf]
        %v1486 = vld [vmem:[%s1482 + $0xc] sm:$0xf]
        %s1487 = scalar_lea.vmem %s999, 2
        %v1488 = vld [vmem:[%s1487] sm:$0x1]
        %v1490 = vperm.slane %v1488, 0
        %v1496 = vunpack.c.l.b16 %v1483
        %v1497 = vunpack.c.l.b16 %v1484
        %v1498 = vunpack.c.l.b16 %v1485
        %v1499 = vunpack.c.l.b16 %v1486
        %v1500 = vpack.c.b16 %v1497, %v1496
        %v1501 = vpack.c.b16 %v1499, %v1498
        %1504 = vmatpush.bf16.msra.mxu0 0
        %1505 = vmatpush.bf16.msra.mxu0 0
        %1506 = vmatpush.bf16.msra.mxu0 0
        %1507 = vmatpush.bf16.msra.mxu0 0
        %1508 = vmatpush.bf16.msra.mxu0 0
        %1509 = vmatpush.bf16.msra.mxu0 0
        %1510 = vmatpush.bf16.msra.mxu0 %v1501
        %1511 = vmatpush.bf16.msra.mxu0 %v1500
        %1512 = vmatmul.bf16.gmra.mxu0 %v1128
        %v1513 = vpop.f32.mrf.mxu0
        %v1514 = vadd.f32 %v1490, %v1513
        %v1515 = vpop.f32.mrf.mxu0
        %1516 = vdwg.mxu0
        %s1517 = scalar_lea.vmem %s1004, 32
        %v1518 = vld [vmem:[%s1517] sm:$0xf]
        %v1519 = vld [vmem:[%s1517 + $0x4] sm:$0xf]
        %v1520 = vld [vmem:[%s1517 + $0x8] sm:$0xf]
        %v1521 = vld [vmem:[%s1517 + $0xc] sm:$0xf]
        %s1522 = scalar_lea.vmem %s1008, 2
        %v1523 = vld [vmem:[%s1522] sm:$0x1]
        %v1525 = vperm.slane %v1523, 0
        %v1531 = vunpack.c.l.b16 %v1518
        %v1532 = vunpack.c.l.b16 %v1519
        %v1533 = vunpack.c.l.b16 %v1520
        %v1534 = vunpack.c.l.b16 %v1521
        %v1535 = vpack.c.b16 %v1532, %v1531
        %v1536 = vpack.c.b16 %v1534, %v1533
        %1539 = vmatpush.bf16.msra.mxu0 0
        %1540 = vmatpush.bf16.msra.mxu0 0
        %1541 = vmatpush.bf16.msra.mxu0 0
        %1542 = vmatpush.bf16.msra.mxu0 0
        %1543 = vmatpush.bf16.msra.mxu0 0
        %1544 = vmatpush.bf16.msra.mxu0 0
        %1545 = vmatpush.bf16.msra.mxu0 %v1536
        %1546 = vmatpush.bf16.msra.mxu0 %v1535
        %1547 = vmatmul.bf16.gmra.mxu0 %v1128
        %v1548 = vpop.f32.mrf.mxu0
        %v1549 = vadd.f32 %v1525, %v1548
        %v1550 = vpop.f32.mrf.mxu0
        %1551 = vdwg.mxu0
        %s1552 = scalar_lea.vmem %s1013, 32
        %v1553 = vld [vmem:[%s1552] sm:$0xf]
        %v1554 = vld [vmem:[%s1552 + $0x4] sm:$0xf]
        %v1555 = vld [vmem:[%s1552 + $0x8] sm:$0xf]
        %v1556 = vld [vmem:[%s1552 + $0xc] sm:$0xf]
        %s1557 = scalar_lea.vmem %s1017, 2
        %v1558 = vld [vmem:[%s1557] sm:$0x1]
        %v1560 = vperm.slane %v1558, 0
        %v1566 = vunpack.c.l.b16 %v1553
        %v1567 = vunpack.c.l.b16 %v1554
        %v1568 = vunpack.c.l.b16 %v1555
        %v1569 = vunpack.c.l.b16 %v1556
        %v1570 = vpack.c.b16 %v1567, %v1566
        %v1571 = vpack.c.b16 %v1569, %v1568
        %1574 = vmatpush.bf16.msra.mxu0 0
        %1575 = vmatpush.bf16.msra.mxu0 0
        %1576 = vmatpush.bf16.msra.mxu0 0
        %1577 = vmatpush.bf16.msra.mxu0 0
        %1578 = vmatpush.bf16.msra.mxu0 0
        %1579 = vmatpush.bf16.msra.mxu0 0
        %1580 = vmatpush.bf16.msra.mxu0 %v1571
        %1581 = vmatpush.bf16.msra.mxu0 %v1570
        %1582 = vmatmul.bf16.gmra.mxu0 %v1128
        %v1583 = vpop.f32.mrf.mxu0
        %v1584 = vadd.f32 %v1560, %v1583
        %v1585 = vpop.f32.mrf.mxu0
        %1586 = vdwg.mxu0
        %v1588 = vsel %vm1212, %v1514, 0
        %v1591 = vsel %vm1212, %v1549, 0
        %1593 = vmatpush.xpose.msra.mxu0 0.0
        %1594 = vmatpush.xpose.msra.mxu0 0.0
        %1595 = vmatpush.xpose.msra.mxu0 0.0
        %1596 = vmatpush.xpose.msra.mxu0 0.0
        %1597 = vmatpush.xpose.msra.mxu0 0.0
        %1598 = vmatpush.xpose.msra.mxu0 0.0
        %1599 = vmatpush.xpose.msra.mxu0 0.0
        %1600 = vmatpush.xpose.msra.mxu0 0.0
        %1601 = vmatpush.xpose.msra.mxu0 0.0
        %1602 = vmatpush.xpose.msra.mxu0 0.0
        %1603 = vmatpush.xpose.msra.mxu0 0.0
        %1604 = vmatpush.xpose.msra.mxu0 0.0
        %1605 = vmatpush.xpose.msra.mxu0 0.0
        %1606 = vmatpush.xpose.msra.mxu0 0.0
        %1607 = vmatpush.xpose.msra.mxu0 0.0
        %1608 = vmatpush.xpose.msra.mxu0 %v1591
        %1609 = vmatmul.f32.gmra.mxu0 %v1588
        %v1610 = vpop.f32.mrf.mxu0
        %v1611 = vadd.f32 %v1210, %v1610
        %1612 = vdwg.mxu0
        %v1613 = vsel %vm1212, %v1611, -inf
        %1614 = vmax.xlane.f32.xlu0 %v1613
        %v1615 = vpop.xlane.xlu0 %1614
        %v1616 = vsub.f32 %v1611, %v1615
        %v1617 = vmul.f32 %v1616, 1.442695
        %v1618 = vpow.pop %v1617
        %v1619 = vsel %vm1212, %v1618, 0.0
        %1620 = vadd.xlane.f32.xlu0 %v1619
        %v1621 = vpop.xlane.xlu0 %1620
        %v1622 = vrcp.pop %v1621
        %v1623 = vmul.f32 %v1618, %v1622
        %v1625 = vsel %vm1212, %v1623, 0
        %1627 = vmatpush.msra.mxu0 0.0
        %1628 = vmatpush.msra.mxu0 0.0
        %1629 = vmatpush.msra.mxu0 0.0
        %1630 = vmatpush.msra.mxu0 0.0
        %1631 = vmatpush.msra.mxu0 0.0
        %1632 = vmatpush.msra.mxu0 0.0
        %1633 = vmatpush.msra.mxu0 0.0
        %1634 = vmatpush.msra.mxu0 0.0
        %1635 = vmatpush.msra.mxu0 0.0
        %1636 = vmatpush.msra.mxu0 0.0
        %1637 = vmatpush.msra.mxu0 0.0
        %1638 = vmatpush.msra.mxu0 0.0
        %1639 = vmatpush.msra.mxu0 0.0
        %1640 = vmatpush.msra.mxu0 0.0
        %1641 = vmatpush.msra.mxu0 0.0
        %1642 = vmatpush.msra.mxu0 %v1584
        %1643 = vmatmul.f32.gmra.mxu0 %v1625
        %v1644 = vpop.f32.mrf.mxu0
        %v1645 = vadd.f32 0.0, %v1644
        %1646 = vdwg.mxu0
        %s1647 = scalar_lea.vmem %s1022, 8
        %v1648 = vld [vmem:[%s1647] sm:$0xf]
        %v1649 = vpack.c.bf16 %v1645, %v1645
        %v1651 = vsel %vm1212, %v1649, 0
        %v1654 = vsel %vm1446, %v1648, 0
        %1656 = vmatpush.bf16.msra.mxu0 0
        %1657 = vmatpush.bf16.msra.mxu0 0
        %1658 = vmatpush.bf16.msra.mxu0 0
        %1659 = vmatpush.bf16.msra.mxu0 0
        %1660 = vmatpush.bf16.msra.mxu0 0
        %1661 = vmatpush.bf16.msra.mxu0 0
        %1662 = vmatpush.bf16.msra.mxu0 0
        %1663 = vmatpush.bf16.msra.mxu0 %v1654
        %1664 = vmatmul.bf16.gmra.mxu0 %v1651
        %v1665 = vpop.f32.mrf.mxu0
        %v1666 = vadd.f32 0.0, %v1665
        %v1667 = vpop.f32.mrf.mxu0
        %1668 = vdwg.mxu0
        %v1669 = vadd.f32 %v1479, %v1666
        %s1670 = scalar_lea.vmem %s995, 48
        %v1671 = vld [vmem:[%s1670] sm:$0xf]
        %v1672 = vld [vmem:[%s1670 + $0x4] sm:$0xf]
        %v1673 = vld [vmem:[%s1670 + $0x8] sm:$0xf]
        %v1674 = vld [vmem:[%s1670 + $0xc] sm:$0xf]
        %s1675 = scalar_lea.vmem %s999, 3
        %v1676 = vld [vmem:[%s1675] sm:$0x1]
        %v1678 = vperm.slane %v1676, 0
        %v1684 = vunpack.c.l.b16 %v1671
        %v1685 = vunpack.c.l.b16 %v1672
        %v1686 = vunpack.c.l.b16 %v1673
        %v1687 = vunpack.c.l.b16 %v1674
        %v1688 = vpack.c.b16 %v1685, %v1684
        %v1689 = vpack.c.b16 %v1687, %v1686
        %1692 = vmatpush.bf16.msra.mxu0 0
        %1693 = vmatpush.bf16.msra.mxu0 0
        %1694 = vmatpush.bf16.msra.mxu0 0
        %1695 = vmatpush.bf16.msra.mxu0 0
        %1696 = vmatpush.bf16.msra.mxu0 0
        %1697 = vmatpush.bf16.msra.mxu0 0
        %1698 = vmatpush.bf16.msra.mxu0 %v1689
        %1699 = vmatpush.bf16.msra.mxu0 %v1688
        %1700 = vmatmul.bf16.gmra.mxu0 %v1128
        %v1701 = vpop.f32.mrf.mxu0
        %v1702 = vadd.f32 %v1678, %v1701
        %v1703 = vpop.f32.mrf.mxu0
        %1704 = vdwg.mxu0
        %s1705 = scalar_lea.vmem %s1004, 48
        %v1706 = vld [vmem:[%s1705] sm:$0xf]
        %v1707 = vld [vmem:[%s1705 + $0x4] sm:$0xf]
        %v1708 = vld [vmem:[%s1705 + $0x8] sm:$0xf]
        %v1709 = vld [vmem:[%s1705 + $0xc] sm:$0xf]
        %s1710 = scalar_lea.vmem %s1008, 3
        %v1711 = vld [vmem:[%s1710] sm:$0x1]
        %v1713 = vperm.slane %v1711, 0
        %v1719 = vunpack.c.l.b16 %v1706
        %v1720 = vunpack.c.l.b16 %v1707
        %v1721 = vunpack.c.l.b16 %v1708
        %v1722 = vunpack.c.l.b16 %v1709
        %v1723 = vpack.c.b16 %v1720, %v1719
        %v1724 = vpack.c.b16 %v1722, %v1721
        %1727 = vmatpush.bf16.msra.mxu0 0
        %1728 = vmatpush.bf16.msra.mxu0 0
        %1729 = vmatpush.bf16.msra.mxu0 0
        %1730 = vmatpush.bf16.msra.mxu0 0
        %1731 = vmatpush.bf16.msra.mxu0 0
        %1732 = vmatpush.bf16.msra.mxu0 0
        %1733 = vmatpush.bf16.msra.mxu0 %v1724
        %1734 = vmatpush.bf16.msra.mxu0 %v1723
        %1735 = vmatmul.bf16.gmra.mxu0 %v1128
        %v1736 = vpop.f32.mrf.mxu0
        %v1737 = vadd.f32 %v1713, %v1736
        %v1738 = vpop.f32.mrf.mxu0
        %1739 = vdwg.mxu0
        %s1740 = scalar_lea.vmem %s1013, 48
        %v1741 = vld [vmem:[%s1740] sm:$0xf]
        %v1742 = vld [vmem:[%s1740 + $0x4] sm:$0xf]
        %v1743 = vld [vmem:[%s1740 + $0x8] sm:$0xf]
        %v1744 = vld [vmem:[%s1740 + $0xc] sm:$0xf]
        %s1745 = scalar_lea.vmem %s1017, 3
        %v1746 = vld [vmem:[%s1745] sm:$0x1]
        %v1748 = vperm.slane %v1746, 0
        %v1754 = vunpack.c.l.b16 %v1741
        %v1755 = vunpack.c.l.b16 %v1742
        %v1756 = vunpack.c.l.b16 %v1743
        %v1757 = vunpack.c.l.b16 %v1744
        %v1758 = vpack.c.b16 %v1755, %v1754
        %v1759 = vpack.c.b16 %v1757, %v1756
        %1762 = vmatpush.bf16.msra.mxu0 0
        %1763 = vmatpush.bf16.msra.mxu0 0
        %1764 = vmatpush.bf16.msra.mxu0 0
        %1765 = vmatpush.bf16.msra.mxu0 0
        %1766 = vmatpush.bf16.msra.mxu0 0
        %1767 = vmatpush.bf16.msra.mxu0 0
        %1768 = vmatpush.bf16.msra.mxu0 %v1759
        %1769 = vmatpush.bf16.msra.mxu0 %v1758
        %1770 = vmatmul.bf16.gmra.mxu0 %v1128
        %v1771 = vpop.f32.mrf.mxu0
        %v1772 = vadd.f32 %v1748, %v1771
        %v1773 = vpop.f32.mrf.mxu0
        %1774 = vdwg.mxu0
        %v1776 = vsel %vm1212, %v1702, 0
        %v1779 = vsel %vm1212, %v1737, 0
        %1781 = vmatpush.xpose.msra.mxu0 0.0
        %1782 = vmatpush.xpose.msra.mxu0 0.0
        %1783 = vmatpush.xpose.msra.mxu0 0.0
        %1784 = vmatpush.xpose.msra.mxu0 0.0
        %1785 = vmatpush.xpose.msra.mxu0 0.0
        %1786 = vmatpush.xpose.msra.mxu0 0.0
        %1787 = vmatpush.xpose.msra.mxu0 0.0
        %1788 = vmatpush.xpose.msra.mxu0 0.0
        %1789 = vmatpush.xpose.msra.mxu0 0.0
        %1790 = vmatpush.xpose.msra.mxu0 0.0
        %1791 = vmatpush.xpose.msra.mxu0 0.0
        %1792 = vmatpush.xpose.msra.mxu0 0.0
        %1793 = vmatpush.xpose.msra.mxu0 0.0
        %1794 = vmatpush.xpose.msra.mxu0 0.0
        %1795 = vmatpush.xpose.msra.mxu0 0.0
        %1796 = vmatpush.xpose.msra.mxu0 %v1779
        %1797 = vmatmul.f32.gmra.mxu0 %v1776
        %v1798 = vpop.f32.mrf.mxu0
        %v1799 = vadd.f32 %v1210, %v1798
        %1800 = vdwg.mxu0
        %v1801 = vsel %vm1212, %v1799, -inf
        %1802 = vmax.xlane.f32.xlu0 %v1801
        %v1803 = vpop.xlane.xlu0 %1802
        %v1804 = vsub.f32 %v1799, %v1803
        %v1805 = vmul.f32 %v1804, 1.442695
        %v1806 = vpow.pop %v1805
        %v1807 = vsel %vm1212, %v1806, 0.0
        %1808 = vadd.xlane.f32.xlu0 %v1807
        %v1809 = vpop.xlane.xlu0 %1808
        %v1810 = vrcp.pop %v1809
        %v1811 = vmul.f32 %v1806, %v1810
        %v1813 = vsel %vm1212, %v1811, 0
        %1815 = vmatpush.msra.mxu0 0.0
        %1816 = vmatpush.msra.mxu0 0.0
        %1817 = vmatpush.msra.mxu0 0.0
        %1818 = vmatpush.msra.mxu0 0.0
        %1819 = vmatpush.msra.mxu0 0.0
        %1820 = vmatpush.msra.mxu0 0.0
        %1821 = vmatpush.msra.mxu0 0.0
        %1822 = vmatpush.msra.mxu0 0.0
        %1823 = vmatpush.msra.mxu0 0.0
        %1824 = vmatpush.msra.mxu0 0.0
        %1825 = vmatpush.msra.mxu0 0.0
        %1826 = vmatpush.msra.mxu0 0.0
        %1827 = vmatpush.msra.mxu0 0.0
        %1828 = vmatpush.msra.mxu0 0.0
        %1829 = vmatpush.msra.mxu0 0.0
        %1830 = vmatpush.msra.mxu0 %v1772
        %1831 = vmatmul.f32.gmra.mxu0 %v1813
        %v1832 = vpop.f32.mrf.mxu0
        %v1833 = vadd.f32 0.0, %v1832
        %1834 = vdwg.mxu0
        %s1835 = scalar_lea.vmem %s1022, 12
        %v1836 = vld [vmem:[%s1835] sm:$0xf]
        %v1837 = vpack.c.bf16 %v1833, %v1833
        %v1839 = vsel %vm1212, %v1837, 0
        %v1842 = vsel %vm1446, %v1836, 0
        %1844 = vmatpush.bf16.msra.mxu0 0
        %1845 = vmatpush.bf16.msra.mxu0 0
        %1846 = vmatpush.bf16.msra.mxu0 0
        %1847 = vmatpush.bf16.msra.mxu0 0
        %1848 = vmatpush.bf16.msra.mxu0 0
        %1849 = vmatpush.bf16.msra.mxu0 0
        %1850 = vmatpush.bf16.msra.mxu0 0
        %1851 = vmatpush.bf16.msra.mxu0 %v1842
        %1852 = vmatmul.bf16.gmra.mxu0 %v1839
        %v1853 = vpop.f32.mrf.mxu0
        %v1854 = vadd.f32 0.0, %v1853
        %v1855 = vpop.f32.mrf.mxu0
        %1856 = vdwg.mxu0
        %v1857 = vadd.f32 %v1669, %v1854
        %v1858 = vld [vmem:[%s1025] sm:$0x1]
        %v1860 = vperm.slane %v1858, 0
        %v1862 = vadd.f32 %v1857, %v1860
        %v1863 = vadd.f32 %v1103, %v1862
        %v1864 = vld [vmem:[%s1028] sm:$0x1]
        %v1865 = vld [vmem:[%s1031] sm:$0x1]
        %v1866 = vsel %vm1126, %v1863, 0.0
        %1867 = vadd.xlane.f32.xlu0 %v1866
        %v1868 = vpop.xlane.xlu0 %1867
        %v1869 = vrcp.pop 32.0
        %v1870 = vmul.f32 32.0, %v1869
        %v1871 = vsub.f32 1.0, %v1870
        %v1872 = vmul.f32 %v1869, %v1871
        %v1873 = vadd.f32 %v1869, %v1872
        %vm1874 = vweird.f32 %v1869
        %v1875 = vsel %vm1874, %v1869, %v1873
        %v1876 = vmul.f32 %v1868, %v1875
        %v1877 = vsub.f32 %v1863, %v1876
        %v1878 = vmul.f32 %v1877, %v1877
        %v1879 = vsel %vm1126, %v1878, 0.0
        %1880 = vadd.xlane.f32.xlu0 %v1879
        %v1881 = vpop.xlane.xlu0 %1880
        %v1882 = vmul.f32 %v1881, %v1875
        %v1883 = vadd.f32 %v1882, 1e-05
        %v1884 = vrsqrt.pop %v1883
        %v1885 = vmul.f32 %v1884, %v1883
        %v1886 = vmul.f32 %v1885, %v1884
        %v1887 = vmul.f32 0.5, %v1886
        %v1888 = vsub.f32 1.5, %v1887
        %v1889 = vmul.f32 %v1884, %v1888
        %vm1890 = vweird.f32 %v1883
        %vm1891 = vweird.f32 %v1884
        %vm1892 = vmor %vm1890, %vm1891
        %v1893 = vsel %vm1892, %v1884, %v1889
        %v1894 = vmul.f32 %v1877, %v1893
        %v1896 = vperm.slane %v1864, 0
        %v1898 = vmul.f32 %v1894, %v1896
        %v1900 = vperm.slane %v1865, 0
        %v1902 = vadd.f32 %v1898, %v1900
        %v1903 = vld [vmem:[%s1036] sm:$0xf]
        %v1904 = vld [vmem:[%s1036 + $0x4] sm:$0xf]
        %v1905 = vld [vmem:[%s1036 + $0x8] sm:$0xf]
        %v1906 = vld [vmem:[%s1036 + $0xc] sm:$0xf]
        %v1907 = vpack.c.bf16 %v1902, %v1902
        %v1908 = vld [vmem:[%s1039] sm:$0x1]
        %v1910 = vperm.slane %v1908, 0
        %v1916 = vunpack.c.l.b16 %v1903
        %v1917 = vunpack.c.l.b16 %v1904
        %v1918 = vunpack.c.l.b16 %v1905
        %v1919 = vunpack.c.l.b16 %v1906
        %v1920 = vpack.c.b16 %v1917, %v1916
        %v1921 = vpack.c.b16 %v1919, %v1918
        %v1925 = vsel %vm1126, %v1907, 0
        %1927 = vmatpush.bf16.msra.mxu0 0
        %1928 = vmatpush.bf16.msra.mxu0 0
        %1929 = vmatpush.bf16.msra.mxu0 0
        %1930 = vmatpush.bf16.msra.mxu0 0
        %1931 = vmatpush.bf16.msra.mxu0 0
        %1932 = vmatpush.bf16.msra.mxu0 0
        %1933 = vmatpush.bf16.msra.mxu0 %v1921
        %1934 = vmatpush.bf16.msra.mxu0 %v1920
        %1935 = vmatmul.bf16.gmra.mxu0 %v1925
        %v1936 = vpop.f32.mrf.mxu0
        %v1937 = vadd.f32 %v1910, %v1936
        %v1938 = vpop.f32.mrf.mxu0
        %1939 = vdwg.mxu0
        %v1940 = vmax.f32 %v1937, 0.0
        %v1941 = vld [vmem:[%s1044] sm:$0xf]
        %v1942 = vld [vmem:[%s1044 + $0x4] sm:$0xf]
        %v1943 = vld [vmem:[%s1044 + $0x8] sm:$0xf]
        %v1944 = vld [vmem:[%s1044 + $0xc] sm:$0xf]
        %v1945 = vld [vmem:[%s1044 + $0x10] sm:$0xf]
        %v1946 = vld [vmem:[%s1044 + $0x14] sm:$0xf]
        %v1947 = vld [vmem:[%s1044 + $0x18] sm:$0xf]
        %v1948 = vld [vmem:[%s1044 + $0x1c] sm:$0xf]
        %v1949 = vpack.c.bf16 %v1940, %v1940
        %v1958 = vunpack.c.l.b16 %v1941
        %v1959 = vunpack.c.l.b16 %v1942
        %v1960 = vunpack.c.l.b16 %v1943
        %v1961 = vunpack.c.l.b16 %v1944
        %v1962 = vunpack.c.l.b16 %v1945
        %v1963 = vunpack.c.l.b16 %v1946
        %v1964 = vunpack.c.l.b16 %v1947
        %v1965 = vunpack.c.l.b16 %v1948
        %v1966 = vpack.c.b16 %v1959, %v1958
        %v1967 = vpack.c.b16 %v1961, %v1960
        %v1968 = vpack.c.b16 %v1963, %v1962
        %v1969 = vpack.c.b16 %v1965, %v1964
        %vm1974 = vcmask 523264
        %v1976 = vsel %vm1974, %v1949, 0
        %1978 = vmatpush.bf16.msra.mxu0 0
        %1979 = vmatpush.bf16.msra.mxu0 0
        %1980 = vmatpush.bf16.msra.mxu0 0
        %1981 = vmatpush.bf16.msra.mxu0 0
        %1982 = vmatpush.bf16.msra.mxu0 %v1969
        %1983 = vmatpush.bf16.msra.mxu0 %v1968
        %1984 = vmatpush.bf16.msra.mxu0 %v1967
        %1985 = vmatpush.bf16.msra.mxu0 %v1966
        %1986 = vmatmul.bf16.gmra.mxu0 %v1976
        %v1987 = vpop.f32.mrf.mxu0
        %v1988 = vadd.f32 0.0, %v1987
        %v1989 = vpop.f32.mrf.mxu0
        %1990 = vdwg.mxu0
        %v1991 = vadd.f32 %v1902, %v1988
        %v1992 = vld [vmem:[%s1047] sm:$0x1]
        %v1994 = vperm.slane %v1992, 0
        %v1996 = vadd.f32 %v1991, %v1994
        %v1997 = vld [vmem:[%s1050] sm:$0x1]
        %v1998 = vld [vmem:[%s1053] sm:$0x1]
        %v1999 = vsel %vm1126, %v1996, 0.0
        %2000 = vadd.xlane.f32.xlu0 %v1999
        %v2001 = vpop.xlane.xlu0 %2000
        %v2002 = vmul.f32 %v2001, %v1875
        %v2003 = vsub.f32 %v1996, %v2002
        %v2004 = vmul.f32 %v2003, %v2003
        %v2005 = vsel %vm1126, %v2004, 0.0
        %2006 = vadd.xlane.f32.xlu0 %v2005
        %v2007 = vpop.xlane.xlu0 %2006
        %v2008 = vmul.f32 %v2007, %v1875
        %v2009 = vadd.f32 %v2008, 1e-05
        %v2010 = vrsqrt.pop %v2009
        %v2011 = vmul.f32 %v2010, %v2009
        %v2012 = vmul.f32 %v2011, %v2010
        %v2013 = vmul.f32 0.5, %v2012
        %v2014 = vsub.f32 1.5, %v2013
        %v2015 = vmul.f32 %v2010, %v2014
        %vm2016 = vweird.f32 %v2009
        %vm2017 = vweird.f32 %v2010
        %vm2018 = vmor %vm2016, %vm2017
        %v2019 = vsel %vm2018, %v2010, %v2015
        %v2020 = vmul.f32 %v2003, %v2019
        %v2022 = vperm.slane %v1997, 0
        %v2024 = vmul.f32 %v2020, %v2022
        %v2026 = vperm.slane %v1998, 0
        %v2028 = vadd.f32 %v2024, %v2026
        %2029 = vst.msk [vmem:[#allocation2] sm:$0xff] %vm1126, %v2028
        %p2030 = scmp.eq.s32.totalorder %s44, 1
        // Predicated region
        $region125: #{sparse_model_forward.1} parent=119 // pred_check
          %p2031 = pneg %p2030
        $region126: #{sparse_model_forward.1} parent=119 // pred_check_branch
          %2033 = sbr.rel (%p2031) target = $region128
        $region127: #{sparse_model_forward.1} parent=119 // pred_region
          %v2034 = vld [vmem:[%s21] sm:$0xf]
          %v2035 = vld [vmem:[%s21 + $0x4] sm:$0xf]
          %v2036 = vld [vmem:[%s21 + $0x8] sm:$0xf]
          %v2037 = vld [vmem:[%s21 + $0xc] sm:$0xf]
          %v2038 = vpack.c.bf16 %v2028, %v2028
          %v2039 = vld [vmem:[%s22] sm:$0x1]
          %v2044 = vunpack.c.l.b16 %v2034
          %v2045 = vunpack.c.l.b16 %v2035
          %v2046 = vunpack.c.l.b16 %v2036
          %v2047 = vunpack.c.l.b16 %v2037
          %v2048 = vpack.c.b16 %v2045, %v2044
          %v2049 = vpack.c.b16 %v2047, %v2046
          %v2053 = vsel %vm1126, %v2038, 0
          %2055 = vmatpush.bf16.msra.mxu0 0
          %2056 = vmatpush.bf16.msra.mxu0 0
          %2057 = vmatpush.bf16.msra.mxu0 0
          %2058 = vmatpush.bf16.msra.mxu0 0
          %2059 = vmatpush.bf16.msra.mxu0 0
          %2060 = vmatpush.bf16.msra.mxu0 0
          %2061 = vmatpush.bf16.msra.mxu0 %v2049
          %2062 = vmatpush.bf16.msra.mxu0 %v2048
          %2063 = vmatmul.bf16.gmra.mxu0 %v2053
          %v2064 = vpop.f32.mrf.mxu0
          %v2065 = vadd.f32 %v2039, %v2064
          %v2066 = vpop.f32.mrf.mxu0
          %2067 = vdwg.mxu0
          %v2068 = vmax.f32 %v2065, 0.0
          %v2069 = vld [vmem:[%s23] sm:$0xf]
          %v2070 = vld [vmem:[%s23 + $0x4] sm:$0xf]
          %v2071 = vld [vmem:[%s23 + $0x8] sm:$0xf]
          %v2072 = vld [vmem:[%s23 + $0xc] sm:$0xf]
          %v2073 = vpack.c.bf16 %v2068, %v2068
          %v2074 = vld [vmem:[%s24] sm:$0x1]
          %v2079 = vunpack.c.l.b16 %v2069
          %v2080 = vunpack.c.l.b16 %v2070
          %v2081 = vunpack.c.l.b16 %v2071
          %v2082 = vunpack.c.l.b16 %v2072
          %v2083 = vpack.c.b16 %v2080, %v2079
          %v2084 = vpack.c.b16 %v2082, %v2081
          %v2088 = vsel %vm1126, %v2073, 0
          %2090 = vmatpush.bf16.msra.mxu0 0
          %2091 = vmatpush.bf16.msra.mxu0 0
          %2092 = vmatpush.bf16.msra.mxu0 0
          %2093 = vmatpush.bf16.msra.mxu0 0
          %2094 = vmatpush.bf16.msra.mxu0 0
          %2095 = vmatpush.bf16.msra.mxu0 0
          %2096 = vmatpush.bf16.msra.mxu0 %v2084
          %2097 = vmatpush.bf16.msra.mxu0 %v2083
          %2098 = vmatmul.bf16.gmra.mxu0 %v2088
          %v2099 = vpop.f32.mrf.mxu0
          %v2100 = vadd.f32 %v2074, %v2099
          %v2101 = vpop.f32.mrf.mxu0
          %2102 = vdwg.mxu0
          %2103 = vst [vmem:[%s983] sm:$0x1] %v2100
        $region128: #{sparse_model_forward.1} parent=119 // pred_fallthru
          _
        %s2104 = sand.u32 %s674, 1
        %s2105 = scalar_lea.sflag [#allocation4], %s2104
        %s2106 = sand.u32 %s674, 1
        %s2107 = scalar_lea.vmem [#allocation3], %s2106
        // Predicated region
        $region129: #{sparse_model_forward.1} parent=119 // pred_check
          %p2108 = pneg %p684
        $region130: #{sparse_model_forward.1} parent=119 // pred_check_branch
          %2110 = sbr.rel (%p2108) target = $region132
        $region131: #{sparse_model_forward.1} parent=119 // pred_region
          %2112 = vsyncadd %s2105, 0
          %s2113 = scalar_lea.hbm %s25, %s43
          %s2115 = sshll.u32 %s2107, 4
          %s2116 = int_to_ptr.vmem [resolvable:$true] %s2115
          %s2117 = sshll.u32 %s2113, 4
          %s2118 = int_to_ptr.hbm [resolvable:$true] %s2117
          %2120 = dma.vmem_to_hbm [thread:$0]  %s2116, 16, %s2118, %s2105
        $region132: #{sparse_model_forward.1} parent=119 // pred_fallthru
          _
      $region120: #{sparse_model_forward.1} parent=5 // pred_fallthru
        _
      %p2121 = scmp.le.s32.totalorder 2, %s34
      // Predicated region
      $region133: #{sparse_model_forward.1} parent=5 // pred_check
        %p2122 = pneg %p2121
      $region134: #{sparse_model_forward.1} parent=5 // pred_check_branch
        %2124 = sbr.rel (%p2122) target = $region136
      $region135: #{sparse_model_forward.1} parent=5 // pred_region
        %s2125 = ssub.s32 %s34, 2
        // Predicated region
        $region137: #{sparse_model_forward.1} parent=135 // pred_check
          %p2126 = pneg %p690
        $region138: #{sparse_model_forward.1} parent=135 // pred_check_branch
          %2128 = sbr.rel (%p2126) target = $region140
        $region139: #{sparse_model_forward.1} parent=135 // pred_region
          %s2129 = sand.u32 %s675, 1
          %s2130 = scalar_lea.sflag [#allocation4], %s2129
          %s2131 = sand.u32 %s675, 1
          %s2132 = scalar_lea.vmem [#allocation3], %s2131
          %2134 = dma.done %s2130, 16
        $region140: #{sparse_model_forward.1} parent=135 // pred_fallthru
          _
      $region136: #{sparse_model_forward.1} parent=5 // pred_fallthru
        _
    $region6: #{sparse_model_forward.1} parent=1 // loop_footer
      %s38 = sadd.s32 1, %s34
    $region7: #{sparse_model_forward.1} parent=1 // loop_footer_branch
      %33 = sbr.rel target = $region3
    $region8: #{sparse_model_forward.1} parent=1 // loop_exit
      _
    %2135 = vsyncpa [#allocation4], 1
    %s2136 = scalar_lea.sflag [#allocation4], 1
    %2137 = vsyncpa %s2136, 1

</llo_original>
